<compile_context>
chip_gen: v7x
topology: tpu7x:2x2x1
jax: 0.10.0
libtpu: 0.0.40
codegen_flags: <defaults>
</compile_context>

<pallas_src>
import functools
import math

import jax
import jax.numpy as jnp
from jax.experimental import pallas as pl
from jax.experimental.pallas import tpu as pltpu


def _round_up(x, m):
    return ((x + m - 1) // m) * m


def _vmem_capacity_bytes():
    """Physical VMEM per TensorCore (64 MiB on v7x, 128 MiB on v5e/v6e)."""
    try:
        return int(pltpu.get_tpu_info().vmem_capacity_bytes)
    except Exception:
        return 128 * 1024 * 1024


# --------------------------------------------------------------------------
# Fused kernel: all GraphConv layers in one pallas_call.
#   grid = (L, R)   L = number of layers (outer, sequential)
#                   R = row tiles of the adjacency (inner)
#   per layer:   HW = H_src @ W_l           (once, at r == 0, bf16 scratch)
#   per tile:    out = adj_tile @ HW + b_l  (f32 accumulate)
#   H ping-pongs between two bf16 slots of a VMEM scratch (slot = layer parity).
# --------------------------------------------------------------------------
def graphnet_fused_kernel(adj_ref, x_ref, w_ref, b_ref, o_ref, *scratch, resident):
    if resident:
        adj_vmem_ref, h_ref, hw_ref = scratch
    else:
        adj_vmem_ref = None
        h_ref, hw_ref = scratch

    l = pl.program_id(0)            # layer index
    r = pl.program_id(1)            # row-tile index
    num_layers = pl.num_programs(0)

    # One-time init: input features go straight into ping-pong slot 0 (single bf16 copy,
    # no separate x buffer); in the resident regime the adjacency is DMA'd into VMEM once
    # for the whole layer stack (single-buffered by construction).
    @pl.when(jnp.logical_and(l == 0, r == 0))
    def _init():
        pltpu.sync_copy(x_ref, h_ref.at[0])
        if resident:
            pltpu.sync_copy(adj_ref, adj_vmem_ref)

    src = l % 2                     # slot holding this layer's input (dynamic, single read)

    # Transform-first: the Fp x Fp matmul (and its bf16 cast) run once per layer.
    @pl.when(r == 0)
    def _transform():
        hw = jnp.dot(h_ref[src], w_ref[0], preferred_element_type=jnp.float32)
        hw_ref[...] = hw.astype(jnp.bfloat16)

    adj_tile = adj_vmem_ref[...] if resident else adj_ref[...]   # bf16
    tm = adj_tile.shape[0]                                        # static rows per tile

    # Aggregation on the MXU: [TM, N_pad]bf16 @ [N_pad, Fp]bf16 -> f32, + bias (f32 epilogue).
    out = jnp.dot(adj_tile, hw_ref[...], preferred_element_type=jnp.float32) + b_ref[0]

    row0 = pl.multiple_of(r * tm, tm)
    not_last = l < num_layers - 1

    # Write this tile of the new hidden state into the *other* slot (skipped on last layer).
    @pl.when(jnp.logical_and(src == 0, not_last))
    def _write_slot1():
        h_ref[1, pl.ds(row0, tm), :] = out.astype(jnp.bfloat16)

    @pl.when(jnp.logical_and(src == 1, not_last))
    def _write_slot0():
        h_ref[0, pl.ds(row0, tm), :] = out.astype(jnp.bfloat16)

    # Final layer: nn.LeakyReLU(-1.0) == abs(); resident output block, single HBM writeback.
    @pl.when(jnp.logical_not(not_last))
    def _finalize():
        o_ref[pl.ds(row0, tm), :] = jnp.abs(out).astype(o_ref.dtype)


# --------------------------------------------------------------------------
# Wrapper: pad to TPU-friendly shapes, stack weights, call the fused kernel.
# --------------------------------------------------------------------------
def graphnet_forward(adj_norm, x, params):
    N = adj_norm.shape[0]
    input_dims = x.shape[1]
    L = len(params)

    # Lane-dense padded feature width (all layer dims here are <= 128).
    dims = [input_dims]
    for (W, _) in params:
        dims.extend(W.shape)
    Fp = _round_up(max(dims), 128)
    # Pad node count so row tiles satisfy the (8,128) layout rules exactly.
    N_pad = _round_up(N, 128)

    vmem_cap = _vmem_capacity_bytes()
    fuse_budget = (5 * vmem_cap) // 8          # ~40 MiB on v7x, ~80 MiB on v5e/v6e

    def _needed_bytes(tm, adj_resident):
        adj_bytes = (N_pad * N_pad * 2 if adj_resident          # single resident bf16 copy
                     else 2 * tm * N_pad * 2)                   # double-buffered bf16 tiles
        return (adj_bytes
                + 2 * N_pad * Fp * 2        # H ping-pong (bf16)
                + N_pad * Fp * 2            # HW scratch (bf16)
                + 2 * Fp * Fp * 2           # W_l (double-buffered, bf16)
                + 2 * Fp * 4                # b_l
                + 2 * N_pad * Fp * 4)       # resident output block (f32)

    resident = _needed_bytes(N_pad, True) <= fuse_budget
    if resident:
        TM = N_pad
    else:
        # Streamed regime: generation-aware row-tile size (larger on 128 MiB parts).
        tm_pref = 512 if vmem_cap >= 96 * 1024 * 1024 else 256
        TM = 128
        for cand in (tm_pref, 256, 128):
            if cand <= N_pad and N_pad % cand == 0 and _needed_bytes(cand, False) <= fuse_budget:
                TM = cand
                break
    R = N_pad // TM

    needed = _needed_bytes(TM, resident)
    vmem_limit = int(min(max(needed + 8 * 1024 * 1024, 32 * 1024 * 1024),
                         (4 * vmem_cap) // 5))

    # --- padded / packed operands (zero padding is exact) ---
    adj_p = jnp.zeros((N_pad, N_pad), jnp.float32).at[:N, :N].set(adj_norm)
    adj_p = adj_p.astype(jnp.bfloat16)
    x_p = jnp.zeros((N_pad, Fp), jnp.float32).at[:N, :input_dims].set(x)
    x_p = x_p.astype(jnp.bfloat16)

    W_stack = jnp.zeros((L, Fp, Fp), jnp.float32)
    b_stack = jnp.zeros((L, 1, Fp), jnp.float32)
    for i, (W, b) in enumerate(params):
        W_stack = W_stack.at[i, :W.shape[0], :W.shape[1]].set(W)
        b_stack = b_stack.at[i, 0, :b.shape[0]].set(b)
    W_stack = W_stack.astype(jnp.bfloat16)

    adj_passes = 1 if resident else L
    cost = pl.CostEstimate(
        flops=2 * L * (N_pad * N_pad * Fp + N_pad * Fp * Fp),
        transcendentals=0,
        bytes_accessed=(adj_passes * N_pad * N_pad * 2 + N_pad * Fp * 2
                        + L * Fp * Fp * 2 + L * Fp * 4 + N_pad * Fp * 4),
    )

    adj_spec = (pl.BlockSpec(memory_space=pl.ANY) if resident
                else pl.BlockSpec((TM, N_pad), lambda l, r: (r, 0)))
    scratch_shapes = []
    if resident:
        scratch_shapes.append(pltpu.VMEM((N_pad, N_pad), jnp.bfloat16))   # resident adjacency
    scratch_shapes += [pltpu.VMEM((2, N_pad, Fp), jnp.bfloat16),          # H ping-pong
                       pltpu.VMEM((N_pad, Fp), jnp.bfloat16)]             # HW = H @ W_l

    grid_spec = pltpu.PrefetchScalarGridSpec(
        num_scalar_prefetch=0,
        grid=(L, R),
        in_specs=[
            adj_spec,                                            # adjacency (resident or tiled)
            pl.BlockSpec(memory_space=pl.ANY),                   # x -> DMA'd into H slot 0
            pl.BlockSpec((1, Fp, Fp), lambda l, r: (l, 0, 0)),   # W_l (double-buffered)
            pl.BlockSpec((1, 1, Fp), lambda l, r: (l, 0, 0)),    # b_l
        ],
        # Resident output block, written only on the final layer -> one HBM writeback.
        out_specs=pl.BlockSpec((N_pad, Fp), lambda l, r: (0, 0)),
        scratch_shapes=scratch_shapes,
    )

    out_p = pl.pallas_call(
        functools.partial(graphnet_fused_kernel, resident=resident),
        out_shape=jax.ShapeDtypeStruct((N_pad, Fp), jnp.float32),
        grid_spec=grid_spec,
        compiler_params=pltpu.CompilerParams(
            # Both axes 'arbitrary': the layer axis is a true sequential dependency and
            # the row axis shares the H / HW scratch across tiles within a layer.
            dimension_semantics=("arbitrary", "arbitrary"),
            vmem_limit_bytes=vmem_limit,
        ),
        cost_estimate=cost,
    )(adj_p, x_p, W_stack, b_stack)

    return out_p[:N, :input_dims]


# --------------------------------------------------------------------------
# Parameter construction (mirrors GraphNet.__init__ layer sizing)
# --------------------------------------------------------------------------
def init_graphnet_params(key, feature_dims, input_dims=1):
    feature_dims = list(feature_dims)
    layer_dims = []
    for i in range(len(feature_dims)):                      # encoder
        fin = feature_dims[i - 1] if i > 0 else input_dims
        layer_dims.append((fin, feature_dims[i]))
    rev = list(reversed(feature_dims))                      # decoder
    for i in range(len(rev)):
        fout = rev[i + 1] if i < len(rev) - 1 else input_dims
        layer_dims.append((rev[i], fout))

    params = []
    for (fin, fout) in layer_dims:
        key, wkey = jax.random.split(key)
        limit = math.sqrt(6.0 / (fin + fout))               # xavier_uniform (DGL default)
        W = jax.random.uniform(wkey, (fin, fout), minval=-limit, maxval=limit,
                               dtype=jnp.float32)
        b = jnp.zeros((fout,), jnp.float32)
        params.append((W, b))
    return params


# --------------------------------------------------------------------------
# References for correctness checking
# --------------------------------------------------------------------------
def graphnet_reference_f32(adj_norm, x, params):
    h = x
    for (W, b) in params:
        h = adj_norm @ h @ W + b[None, :]
    return jnp.abs(h)


def graphnet_reference_bf16(adj_norm, x, params):
    # Mirrors the kernel's mixed precision and matmul order:
    # transform-first, bf16 MXU inputs, f32 accumulation, bf16 hidden state between layers.
    adj = adj_norm.astype(jnp.bfloat16)
    h = x.astype(jnp.bfloat16)
    out = None
    for (W, b) in params:
        hw = jnp.dot(h, W.astype(jnp.bfloat16), preferred_element_type=jnp.float32)
        out = jnp.dot(adj, hw.astype(jnp.bfloat16),
                      preferred_element_type=jnp.float32) + b[None, :]
        h = out.astype(jnp.bfloat16)
    return jnp.abs(out)


# --------------------------------------------------------------------------
# Graph preprocessing: symmetrically-normalized adjacency (DGL norm='both')
# --------------------------------------------------------------------------
def normalize_adjacency(A):
    out_deg = jnp.clip(A.sum(axis=0), 1.0, None)
    in_deg = jnp.clip(A.sum(axis=1), 1.0, None)
    return (1.0 / jnp.sqrt(in_deg))[:, None] * A * (1.0 / jnp.sqrt(out_deg))[None, :]


if __name__ == "__main__":
    key = jax.random.PRNGKey(0)
    k_feat, k_adj, k_param = jax.random.split(key, 3)

    # Small synthetic graph: N nodes, symmetric, ring + random edges
    N = 256
    input_dims = 1
    feature_dims = [8, 16]

    rand = jax.random.uniform(k_adj, (N, N))
    A = (rand < 0.15).astype(jnp.float32)
    A = jnp.maximum(A, A.T)                         # symmetrize
    A = A * (1.0 - jnp.eye(N, dtype=jnp.float32))   # drop self loops
    ring = jnp.roll(jnp.eye(N, dtype=jnp.float32), 1, axis=1)
    A = jnp.clip(A + ring + ring.T, 0.0, 1.0)       # guarantee nonzero degree

    adj_norm = normalize_adjacency(A)

    # node feature 'broad_neu_energy': [N, input_dims]
    x = jax.random.normal(k_feat, (N, input_dims), dtype=jnp.float32)

    params = init_graphnet_params(k_param, feature_dims, input_dims=input_dims)

    fwd = jax.jit(graphnet_forward)
    out = fwd(adj_norm, x, params)
    out = jax.block_until_ready(out)

    assert out.shape == (N, input_dims)

    # Tight check against a reference that mimics the kernel's mixed precision / matmul order.
    ref_bf16 = graphnet_reference_bf16(adj_norm, x, params)
    assert jnp.allclose(out, ref_bf16, rtol=1e-2, atol=1e-3), (
        float(jnp.max(jnp.abs(out - ref_bf16))))

    # Loose sanity check against the pure-f32 semantics of the torch module.
    ref_f32 = graphnet_reference_f32(adj_norm, x, params)
    assert jnp.allclose(out, ref_f32, rtol=1e-1, atol=5e-2), (
        float(jnp.max(jnp.abs(out - ref_f32))))

    print("KERNEL_OK")
</pallas_src>

<mosaic_0001>
module attributes {stable_mosaic.version = 11 : i64} {
  func.func @graphnet_fused_kernel(%arg0: i32, %arg1: i32, %arg2: memref<256x256xbf16, #tpu.memory_space<any>>, %arg3: memref<256x128xbf16, #tpu.memory_space<any>>, %arg4: memref<1x128x128xbf16, #tpu.memory_space<vmem>>, %arg5: memref<1x1x128xf32, #tpu.memory_space<vmem>>, %arg6: memref<256x128xf32, #tpu.memory_space<vmem>>, %arg7: memref<256x256xbf16, #tpu.memory_space<vmem>>, %arg8: memref<2x256x128xbf16, #tpu.memory_space<vmem>>, %arg9: memref<256x128xbf16, #tpu.memory_space<vmem>>) attributes {dimension_semantics = [#tpu.dimension_semantics<arbitrary>, #tpu.dimension_semantics<arbitrary>], iteration_bounds = array<i64: 4, 1>, scalar_prefetch = 0 : i64, scratch_operands = 3 : i64, tpu.core_type = #tpu.core_type<tc>, window_params = [{}, {}, {transform_indices = @transform_2, window_bounds = array<i64: 1, 128, 128>}, {transform_indices = @transform_3, window_bounds = array<i64: 1, 1, 128>}, {pipeline_mode = #tpu.pipeline_mode<synchronous>, transform_indices = @transform_4, window_bounds = array<i64: 256, 128>}]} {
    %c0_i32 = arith.constant 0 : i32
    %0 = arith.cmpi eq, %arg0, %c0_i32 : i32
    %c0_i32_0 = arith.constant 0 : i32
    %1 = arith.cmpi eq, %arg1, %c0_i32_0 : i32
    %2 = arith.andi %0, %1 : i1
    %3 = arith.extui %2 : i1 to i32
    %c0_i32_1 = arith.constant 0 : i32
    %4 = arith.cmpi ne, %3, %c0_i32_1 : i32
    scf.if %4 {
      %c0_i32_19 = arith.constant 0 : i32
      "tpu.region"() ({
        %39 = tpu.sem_alloc : memref<!tpu.dma_semaphore, #tpu.memory_space<semaphore_mem>>
        %c0_i32_20 = arith.constant 0 : i32
        %c0_i32_21 = arith.constant 0 : i32
        %40 = tpu.memref_slice %arg8[%c0_i32_19, %c0_i32_20, %c0_i32_21] : memref<2x256x128xbf16, #tpu.memory_space<vmem>> -> memref<1x256x128xbf16, #tpu.memory_space<vmem>>
        %41 = tpu.memref_squeeze %40 : memref<1x256x128xbf16, #tpu.memory_space<vmem>> -> memref<256x128xbf16, #tpu.memory_space<vmem>>
        tpu.enqueue_dma source(%arg3 : memref<256x128xbf16, #tpu.memory_space<any>>) target(%41 : memref<256x128xbf16, #tpu.memory_space<vmem>>) target_semaphore(%39 : memref<!tpu.dma_semaphore, #tpu.memory_space<semaphore_mem>>)
        %c0_i32_22 = arith.constant 0 : i32
        %c0_i32_23 = arith.constant 0 : i32
        %42 = tpu.memref_slice %arg8[%c0_i32_19, %c0_i32_22, %c0_i32_23] : memref<2x256x128xbf16, #tpu.memory_space<vmem>> -> memref<1x256x128xbf16, #tpu.memory_space<vmem>>
        %43 = tpu.memref_squeeze %42 : memref<1x256x128xbf16, #tpu.memory_space<vmem>> -> memref<256x128xbf16, #tpu.memory_space<vmem>>
        tpu.wait_dma2 semaphore(%39 : memref<!tpu.dma_semaphore, #tpu.memory_space<semaphore_mem>>) src(%arg3 : memref<256x128xbf16, #tpu.memory_space<any>>) dst(%43 : memref<256x128xbf16, #tpu.memory_space<vmem>>)
        tpu.yield
      }) : () -> ()
      "tpu.region"() ({
        %39 = tpu.sem_alloc : memref<!tpu.dma_semaphore, #tpu.memory_space<semaphore_mem>>
        tpu.enqueue_dma source(%arg2 : memref<256x256xbf16, #tpu.memory_space<any>>) target(%arg7 : memref<256x256xbf16, #tpu.memory_space<vmem>>) target_semaphore(%39 : memref<!tpu.dma_semaphore, #tpu.memory_space<semaphore_mem>>)
        tpu.wait_dma2 semaphore(%39 : memref<!tpu.dma_semaphore, #tpu.memory_space<semaphore_mem>>) src(%arg2 : memref<256x256xbf16, #tpu.memory_space<any>>) dst(%arg7 : memref<256x256xbf16, #tpu.memory_space<vmem>>)
        tpu.yield
      }) : () -> ()
    } else {
    }
    %c2_i32 = arith.constant 2 : i32
    %c0_i32_2 = arith.constant 0 : i32
    %5 = arith.cmpi eq, %c2_i32, %c0_i32_2 : i32
    %c1_i32 = arith.constant 1 : i32
    %6 = arith.select %5, %c1_i32, %c2_i32 : i32
    %7 = arith.remsi %arg0, %6 : i32
    %c0_i32_3 = arith.constant 0 : i32
    %8 = arith.cmpi ne, %7, %c0_i32_3 : i32
    %c0_i32_4 = arith.constant 0 : i32
    %9 = arith.cmpi slt, %7, %c0_i32_4 : i32
    %c0_i32_5 = arith.constant 0 : i32
    %10 = arith.cmpi slt, %6, %c0_i32_5 : i32
    %11 = arith.xori %9, %10 : i1
    %12 = arith.andi %11, %8 : i1
    %13 = arith.addi %7, %6 : i32
    %14 = arith.select %12, %13, %7 : i32
    %c0_i32_6 = arith.constant 0 : i32
    %15 = arith.cmpi eq, %arg1, %c0_i32_6 : i32
    %16 = arith.extui %15 : i1 to i32
    %c0_i32_7 = arith.constant 0 : i32
    %17 = arith.cmpi ne, %16, %c0_i32_7 : i32
    scf.if %17 {
      %39 = arith.index_cast %14 : i32 to index
      %c0_19 = arith.constant 0 : index
      %c0_20 = arith.constant 0 : index
      %40 = vector.load %arg8[%39, %c0_19, %c0_20] : memref<2x256x128xbf16, #tpu.memory_space<vmem>>, vector<1x256x128xbf16>
      %41 = vector.shape_cast %40 : vector<1x256x128xbf16> to vector<256x128xbf16>
      %c0_21 = arith.constant 0 : index
      %c0_22 = arith.constant 0 : index
      %c0_23 = arith.constant 0 : index
      %42 = vector.load %arg4[%c0_21, %c0_22, %c0_23] : memref<1x128x128xbf16, #tpu.memory_space<vmem>>, vector<1x128x128xbf16>
      %43 = vector.shape_cast %42 : vector<1x128x128xbf16> to vector<128x128xbf16>
      %cst_24 = arith.constant dense<0.000000e+00> : vector<256x128xf32>
      %44 = tpu.matmul %41, %43, %cst_24 {dimension_numbers = #tpu.dot_dimension_numbers<[1], [0], [0], [1], [0, 0, 1, 1], [], []>} : vector<256x128xbf16>, vector<128x128xbf16>, vector<256x128xf32> -> vector<256x128xf32>
      %45 = arith.truncf %44 : vector<256x128xf32> to vector<256x128xbf16>
      %c0_25 = arith.constant 0 : index
      %c0_26 = arith.constant 0 : index
      %46 = vector.load %arg9[%c0_25, %c0_26] : memref<256x128xbf16, #tpu.memory_space<vmem>>, vector<256x128xbf16>
      tpu.vector_store %arg9[%c0_25, %c0_26], %45 {strides = array<i32>} : memref<256x128xbf16, #tpu.memory_space<vmem>>, vector<256x128xbf16>,
    } else {
    }
    %c0 = arith.constant 0 : index
    %c0_8 = arith.constant 0 : index
    %18 = vector.load %arg7[%c0, %c0_8] : memref<256x256xbf16, #tpu.memory_space<vmem>>, vector<256x256xbf16>
    %c0_9 = arith.constant 0 : index
    %c0_10 = arith.constant 0 : index
    %19 = vector.load %arg9[%c0_9, %c0_10] : memref<256x128xbf16, #tpu.memory_space<vmem>>, vector<256x128xbf16>
    %cst = arith.constant dense<0.000000e+00> : vector<256x128xf32>
    %20 = tpu.matmul %18, %19, %cst {dimension_numbers = #tpu.dot_dimension_numbers<[1], [0], [0], [1], [0, 0, 1, 1], [], []>} : vector<256x256xbf16>, vector<256x128xbf16>, vector<256x128xf32> -> vector<256x128xf32>
    %c0_11 = arith.constant 0 : index
    %c0_12 = arith.constant 0 : index
    %c0_13 = arith.constant 0 : index
    %21 = vector.load %arg5[%c0_11, %c0_12, %c0_13] : memref<1x1x128xf32, #tpu.memory_space<vmem>>, vector<1x1x128xf32>
    %22 = vector.shape_cast %21 : vector<1x1x128xf32> to vector<1x128xf32>
    %23 = vector.broadcast %22 : vector<1x128xf32> to vector<256x128xf32>
    %24 = arith.addf %20, %23 : vector<256x128xf32>
    %c256_i32 = arith.constant 256 : i32
    %25 = arith.muli %arg1, %c256_i32 : i32
    %26 = tpu.assume_multiple %25, 256 : i32
    %c3_i32 = arith.constant 3 : i32
    %27 = arith.cmpi slt, %arg0, %c3_i32 : i32
    %c0_i32_14 = arith.constant 0 : i32
    %28 = arith.cmpi eq, %14, %c0_i32_14 : i32
    %29 = arith.andi %28, %27 : i1
    %30 = arith.extui %29 : i1 to i32
    %c0_i32_15 = arith.constant 0 : i32
    %31 = arith.cmpi ne, %30, %c0_i32_15 : i32
    scf.if %31 {
      %39 = arith.truncf %24 : vector<256x128xf32> to vector<256x128xbf16>
      %c1 = arith.constant 1 : index
      %40 = arith.index_cast %26 : i32 to index
      %c0_19 = arith.constant 0 : index
      %41 = vector.load %arg8[%c1, %40, %c0_19] : memref<2x256x128xbf16, #tpu.memory_space<vmem>>, vector<1x256x128xbf16>
      %42 = vector.shape_cast %41 : vector<1x256x128xbf16> to vector<256x128xbf16>
      %43 = vector.shape_cast %39 : vector<256x128xbf16> to vector<1x256x128xbf16>
      tpu.vector_store %arg8[%c1, %40, %c0_19], %43 {strides = array<i32>} : memref<2x256x128xbf16, #tpu.memory_space<vmem>>, vector<1x256x128xbf16>,
    } else {
    }
    %c1_i32_16 = arith.constant 1 : i32
    %32 = arith.cmpi eq, %14, %c1_i32_16 : i32
    %33 = arith.andi %32, %27 : i1
    %34 = arith.extui %33 : i1 to i32
    %c0_i32_17 = arith.constant 0 : i32
    %35 = arith.cmpi ne, %34, %c0_i32_17 : i32
    scf.if %35 {
      %39 = arith.truncf %24 : vector<256x128xf32> to vector<256x128xbf16>
      %c0_19 = arith.constant 0 : index
      %40 = arith.index_cast %26 : i32 to index
      %c0_20 = arith.constant 0 : index
      %41 = vector.load %arg8[%c0_19, %40, %c0_20] : memref<2x256x128xbf16, #tpu.memory_space<vmem>>, vector<1x256x128xbf16>
      %42 = vector.shape_cast %41 : vector<1x256x128xbf16> to vector<256x128xbf16>
      %43 = vector.shape_cast %39 : vector<256x128xbf16> to vector<1x256x128xbf16>
      tpu.vector_store %arg8[%c0_19, %40, %c0_20], %43 {strides = array<i32>} : memref<2x256x128xbf16, #tpu.memory_space<vmem>>, vector<1x256x128xbf16>,
    } else {
    }
    %true = arith.constant true
    %36 = arith.xori %27, %true : i1
    %37 = arith.extui %36 : i1 to i32
    %c0_i32_18 = arith.constant 0 : i32
    %38 = arith.cmpi ne, %37, %c0_i32_18 : i32
    scf.if %38 {
      %39 = math.absf %24 : vector<256x128xf32>
      %40 = arith.index_cast %26 : i32 to index
      %c0_19 = arith.constant 0 : index
      %41 = vector.load %arg6[%40, %c0_19] : memref<256x128xf32, #tpu.memory_space<vmem>>, vector<256x128xf32>
      tpu.vector_store %arg6[%40, %c0_19], %39 {strides = array<i32>} : memref<256x128xf32, #tpu.memory_space<vmem>>, vector<256x128xf32>,
    } else {
    }
    return
  }
  func.func @transform_2(%arg0: i32, %arg1: i32) -> (i32, i32, i32) {
    %c0_i32 = arith.constant 0 : i32
    %c0_i32_0 = arith.constant 0 : i32
    %c0_i32_1 = arith.constant 0 : i32
    return %arg0, %c0_i32, %c0_i32_0 : i32, i32, i32
  }
  func.func @transform_3(%arg0: i32, %arg1: i32) -> (i32, i32, i32) {
    %c0_i32 = arith.constant 0 : i32
    %c0_i32_0 = arith.constant 0 : i32
    %c0_i32_1 = arith.constant 0 : i32
    return %arg0, %c0_i32, %c0_i32_0 : i32, i32, i32
  }
  func.func @transform_4(%arg0: i32, %arg1: i32) -> (i32, i32) {
    %c0_i32 = arith.constant 0 : i32
    %c0_i32_0 = arith.constant 0 : i32
    %c0_i32_1 = arith.constant 0 : i32
    return %c0_i32, %c0_i32_0 : i32, i32
  }
}

</mosaic_0001>

<llo_original>
// kernel: graphnet_forward.1
$region0: #{graphnet_forward.1}
  #allocation0 [shape = 'u32[]', space=smem, size = 0x4, offset = 0x4, fixed_abs, tag = 'smem constant byte address 0x4 - core index']
  #allocation1 [shape = 'u32[144,128]{1,0:T(1,128)}', space=vmem, size = 0x12000, scoped, tag = 'internal scratch']
  #allocation2 [shape = 'bf16[256,256]{1,0:T(16,128)(2,1)}', space=vmem, size = 0x20000, scoped, tag = 'scratch operand']
  #allocation3 [shape = 'bf16[2,256,128]{2,1,0:T(16,128)(2,1)}', space=vmem, size = 0x20000, scoped, tag = 'scratch operand']
  #allocation4 [shape = 'bf16[256,128]{1,0:T(16,128)(2,1)}', space=vmem, size = 0x10000, scoped, tag = 'scratch operand']
  #allocation6 [shape = 's32[]', space=sflag, size = 0x4, offset = 0, fixed_abs, tag = 'sflag constant byte address 0x0 - dummy sync flag']
  #allocation8 [shape = 's32[]', space=sflag, size = 0x4, offset = 0, fixed_abs, tag = 'sflag constant byte address 0x0 - dummy sync flag']
  %s0 = inlined_call_operand.vmem [shape: bf16[256,256], index: 0, kind: input, shape index: {}]
  %s1 = inlined_call_operand.vmem [shape: bf16[256,128], index: 1, kind: input, shape index: {}]
  %s2 = inlined_call_operand.vmem [shape: bf16[4,128,128], index: 2, kind: input, shape index: {}]
  %s3 = inlined_call_operand.vmem [shape: f32[4,1,128], index: 3, kind: input, shape index: {}]
  %s4 = inlined_call_operand.vmem [shape: f32[256,128], index: 4, kind: output, shape index: {}]
  %s5 = sld [smem:[#allocation0]]
  $region134: #{graphnet_forward.1} parent=0
    _
  %s7 = ssub.s32 1, %s5
  %s8 = scalar_select 0, %s7, %s5
  loop: start=0, step=1, limit=6
  $region2: #{graphnet_forward.1} parent=0 // loop_pre_header
    _
  $region3: #{graphnet_forward.1} parent=0 // loop_header
    %s10 = sphi 0, %s14
    %p11 = scmp.ge.s32.totalorder %s10, 6
    %s17 = sphi 0, %s29
    %s18 = sphi 0, %s25
    %s19 = sphi 0, %s17
    %s20 = sphi 0, %s18
    %s21 = sphi 0, %s19
    %s22 = sphi 0, %s20
    %s32 = sphi 0, %s34
    %s35 = sphi 0, %s32
    %s36 = sphi 0, %s35
    %s52 = sphi 0, %s36
    %s58 = sphi 0, %s60
    %s61 = sphi 0, %s58
    %s62 = sphi 0, %s61
    %s78 = sphi 0, %s62
    %s82 = sphi 0, %s82
    %s84 = sphi 0, %s82
    %s85 = sphi 0, %s84
    %s99 = sphi 0, %s85
  $region4: #{graphnet_forward.1} parent=0 // loop_header_branch
    %13 = sbr.rel (%p11) target = $region8
  $region5: #{graphnet_forward.1} parent=0 // loop_body
    %s15 = ssub.s32 %s10, 1
    %s16 = ssub.s32 %s10, 2
    %s23 = sadd.s32 1, %s18
    %p24 = scmp.ge.s32.totalorder %s23, 1
    %s25 = scalar_select %p24, 0, %s23
    %s26 = sadd.s32 1, %s17
    %s27 = scalar_select %p24, %s26, %s17
    %p28 = scmp.ge.s32.totalorder %s27, 4
    %s29 = scalar_select %p28, 0, %s27
    %s30 = ssub.s32 %s17, %s29
    %p31 = scmp.eq.s32.totalorder %s30, 0
    %s33 = sadd.s32 %s32, 1
    %s34 = scalar_select %p31, %s32, %s33
    %p37 = pneg %p31
    %p38 = scmp.eq.s32.totalorder %s10, 3
    %p39 = por %p37, %p38
    %p40 = scmp.ne.s32.totalorder %s32, %s35
    %p41 = scmp.eq.s32.totalorder %s10, 0
    %p42 = por %p40, %p41
    %p43 = scmp.ne.s32.totalorder %s32, %s35
    %p44 = scmp.eq.s32.totalorder %s15, 3
    %p45 = por %p43, %p44
    %p46 = scmp.ne.s32.totalorder %s35, %s36
    %p47 = scmp.eq.s32.totalorder %s15, 0
    %p48 = por %p46, %p47
    %p49 = scmp.ne.s32.totalorder %s35, %s36
    %p50 = scmp.eq.s32.totalorder %s16, 3
    %p51 = por %p49, %p50
    %p53 = scmp.ne.s32.totalorder %s36, %s52
    %p54 = scmp.eq.s32.totalorder %s16, 0
    %p55 = por %p53, %p54
    %s56 = ssub.s32 %s17, %s29
    %p57 = scmp.eq.s32.totalorder %s56, 0
    %s59 = sadd.s32 %s58, 1
    %s60 = scalar_select %p57, %s58, %s59
    %p63 = pneg %p57
    %p64 = scmp.eq.s32.totalorder %s10, 3
    %p65 = por %p63, %p64
    %p66 = scmp.ne.s32.totalorder %s58, %s61
    %p67 = scmp.eq.s32.totalorder %s10, 0
    %p68 = por %p66, %p67
    %p69 = scmp.ne.s32.totalorder %s58, %s61
    %p70 = scmp.eq.s32.totalorder %s15, 3
    %p71 = por %p69, %p70
    %p72 = scmp.ne.s32.totalorder %s61, %s62
    %p73 = scmp.eq.s32.totalorder %s15, 0
    %p74 = por %p72, %p73
    %p75 = scmp.ne.s32.totalorder %s61, %s62
    %p76 = scmp.eq.s32.totalorder %s16, 3
    %p77 = por %p75, %p76
    %p79 = scmp.ne.s32.totalorder %s62, %s78
    %p80 = scmp.eq.s32.totalorder %s16, 0
    %p81 = por %p79, %p80
    %s83 = sadd.s32 %s82, 1
    %p86 = scmp.eq.s32.totalorder %s10, 3
    %p87 = scmp.ne.s32.totalorder %s82, %s84
    %p88 = scmp.eq.s32.totalorder %s10, 0
    %p89 = por %p87, %p88
    %p90 = scmp.ne.s32.totalorder %s82, %s84
    %p91 = scmp.eq.s32.totalorder %s15, 3
    %p92 = por %p90, %p91
    %p93 = scmp.ne.s32.totalorder %s84, %s85
    %p94 = scmp.eq.s32.totalorder %s15, 0
    %p95 = por %p93, %p94
    %p96 = scmp.ne.s32.totalorder %s84, %s85
    %p97 = scmp.eq.s32.totalorder %s16, 3
    %p98 = por %p96, %p97
    %p100 = scmp.ne.s32.totalorder %s85, %s99
    %p101 = scmp.eq.s32.totalorder %s16, 0
    %p102 = por %p100, %p101
    %p103 = scmp.le.s32.totalorder 1, %s10
    %p104 = scmp.lt.s32.totalorder %s10, 5
    %p105 = pnand %p103, %p104
    %p106 = pneg %p105
    // Predicated region
    $region9: #{graphnet_forward.1} parent=5 // pred_check
      _
    $region10: #{graphnet_forward.1} parent=5 // pred_check_branch
      %108 = sbr.rel (%p105) target = $region12
    $region11: #{graphnet_forward.1} parent=5 // pred_region
      %s109 = ssub.s32 %s10, 1
    $region12: #{graphnet_forward.1} parent=5 // pred_fallthru
      _
    %p110 = scmp.lt.s32.totalorder %s10, 4
    // Predicated region
    $region13: #{graphnet_forward.1} parent=5 // pred_check
      %p111 = pneg %p110
    $region14: #{graphnet_forward.1} parent=5 // pred_check_branch
      %113 = sbr.rel (%p111) target = $region16
    $region15: #{graphnet_forward.1} parent=5 // pred_region
      // Predicated region
      $region17: #{graphnet_forward.1} parent=15 // pred_check
        %p114 = pneg %p42
      $region18: #{graphnet_forward.1} parent=15 // pred_check_branch
        %116 = sbr.rel (%p114) target = $region20
      $region19: #{graphnet_forward.1} parent=15 // pred_region
        %p117 = scmp.lt.s32.totalorder %s17, 3
        %s118 = scalar_select %p117, %s17, 3
        %s119 = smul.addr %s118, 16
        %s120 = smul.addr %s119, 4
        %s121 = scalar_lea.vmem %s2, %s120
      $region20: #{graphnet_forward.1} parent=15 // pred_fallthru
        _
      // Predicated region
      $region21: #{graphnet_forward.1} parent=15 // pred_check
        %p122 = pneg %p68
      $region22: #{graphnet_forward.1} parent=15 // pred_check_branch
        %124 = sbr.rel (%p122) target = $region24
      $region23: #{graphnet_forward.1} parent=15 // pred_region
        %p125 = scmp.lt.s32.totalorder %s17, 3
        %s126 = scalar_select %p125, %s17, 3
        %s127 = scalar_lea.vmem %s3, %s126
      $region24: #{graphnet_forward.1} parent=15 // pred_fallthru
        _
    $region16: #{graphnet_forward.1} parent=5 // pred_fallthru
      _
    %p128 = scmp.le.s32.totalorder 1, %s10
    %p129 = scmp.lt.s32.totalorder %s10, 5
    %p130 = pnand %p128, %p129
    %p131 = pneg %p130
    // Predicated region
    $region25: #{graphnet_forward.1} parent=5 // pred_check
      _
    $region26: #{graphnet_forward.1} parent=5 // pred_check_branch
      %133 = sbr.rel (%p130) target = $region28
    $region27: #{graphnet_forward.1} parent=5 // pred_region
      %s134 = ssub.s32 %s10, 1
      %p135 = scmp.lt.s32.totalorder %s19, 3
      %s136 = scalar_select %p135, %s19, 3
      %s137 = smul.addr %s136, 16
      %s138 = smul.addr %s137, 4
      %s139 = scalar_lea.vmem %s2, %s138
      %p140 = pneg %p48
      %p141 = pneg %p45
      %p142 = scmp.lt.s32.totalorder %s19, 3
      %s143 = scalar_select %p142, %s19, 3
      %s144 = scalar_lea.vmem %s3, %s143
      %p145 = pneg %p74
      %p146 = pneg %p71
      %p147 = pneg %p95
      %p148 = pneg %p92
      %p149 = scmp.lt.s32.totalorder %s19, 3
      %s150 = scalar_select %p149, %s19, 3
      %s151 = smul.addr %s150, 16
      %s152 = smul.addr %s151, 4
      %s153 = scalar_lea.vmem %s2, %s152
      %p154 = scmp.lt.s32.totalorder %s19, 3
      %s155 = scalar_select %p154, %s19, 3
      %s156 = scalar_lea.vmem %s3, %s155
      %p158 = scmp.eq.s32.totalorder %s19, 0
      %p159 = scmp.eq.s32.totalorder %s20, 0
      %p160 = pnand %p158, %p159
      %p161 = pneg %p160
      // Predicated region
      $region29: #{graphnet_forward.1} parent=27 // pred_check
        _
      $region30: #{graphnet_forward.1} parent=27 // pred_check_branch
        %163 = sbr.rel (%p160) target = $region32
      $region31: #{graphnet_forward.1} parent=27 // pred_region
        $region33: #{graphnet_forward.1} parent=31
          #allocation5 [shape = 's32[1]{0}', space=sflag, size = 0x4, scoped, tag = 'scoped memory for graphnet_forward.1']
          %p165 = scmp.lt.u32.totalorder 128, 8
          %p166 = pneg %p165
          // Predicated region
          $region34: #{graphnet_forward.1} parent=33 // pred_check
            _
          $region35: #{graphnet_forward.1} parent=33 // pred_check_branch
            %168 = sbr.rel (%p165) target = $region37
          $region36: #{graphnet_forward.1} parent=33 // pred_region
            %s183 = sand.u32 128, 7
            %p184 = scmp.eq.s32.totalorder %s183, 0
            // Predicated region
            $region49: #{graphnet_forward.1} parent=36 // pred_check
              %p185 = pneg %p184
            $region50: #{graphnet_forward.1} parent=36 // pred_check_branch
              %187 = sbr.rel (%p185) target = $region52
            $region51: #{graphnet_forward.1} parent=36 // pred_region
              loop: start=0, step=1, limit=1
              $region53: #{graphnet_forward.1} parent=51 // loop_pre_header
                _
              $region54: #{graphnet_forward.1} parent=51 // loop_header
                %s189 = sphi 0, %s193
                %p190 = scmp.ge.s32.totalorder %s189, 1
                %s194 = sphi %s1, %s1
                %s195 = sphi [#allocation3], [#allocation3]
              $region55: #{graphnet_forward.1} parent=51 // loop_header_branch
                %192 = sbr.rel (%p190) target = $region59
              $region56: #{graphnet_forward.1} parent=51 // loop_body
                %v196 = vld [vmem:[%s194] sm:$0xff]
                %197 = vst [vmem:[%s195] sm:$0xff] %v196
                %v198 = vld [vmem:[%s194 + $0x8] sm:$0xff]
                %199 = vst [vmem:[%s195 + $0x8] sm:$0xff] %v198
                %v200 = vld [vmem:[%s194 + $0x10] sm:$0xff]
                %201 = vst [vmem:[%s195 + $0x10] sm:$0xff] %v200
                %v202 = vld [vmem:[%s194 + $0x18] sm:$0xff]
                %203 = vst [vmem:[%s195 + $0x18] sm:$0xff] %v202
                %v204 = vld [vmem:[%s194 + $0x20] sm:$0xff]
                %205 = vst [vmem:[%s195 + $0x20] sm:$0xff] %v204
                %v206 = vld [vmem:[%s194 + $0x28] sm:$0xff]
                %207 = vst [vmem:[%s195 + $0x28] sm:$0xff] %v206
                %v208 = vld [vmem:[%s194 + $0x30] sm:$0xff]
                %209 = vst [vmem:[%s195 + $0x30] sm:$0xff] %v208
                %v210 = vld [vmem:[%s194 + $0x38] sm:$0xff]
                %211 = vst [vmem:[%s195 + $0x38] sm:$0xff] %v210
                %v212 = vld [vmem:[%s194 + $0x40] sm:$0xff]
                %213 = vst [vmem:[%s195 + $0x40] sm:$0xff] %v212
                %v214 = vld [vmem:[%s194 + $0x48] sm:$0xff]
                %215 = vst [vmem:[%s195 + $0x48] sm:$0xff] %v214
                %v216 = vld [vmem:[%s194 + $0x50] sm:$0xff]
                %217 = vst [vmem:[%s195 + $0x50] sm:$0xff] %v216
                %v218 = vld [vmem:[%s194 + $0x58] sm:$0xff]
                %219 = vst [vmem:[%s195 + $0x58] sm:$0xff] %v218
                %v220 = vld [vmem:[%s194 + $0x60] sm:$0xff]
                %221 = vst [vmem:[%s195 + $0x60] sm:$0xff] %v220
                %v222 = vld [vmem:[%s194 + $0x68] sm:$0xff]
                %223 = vst [vmem:[%s195 + $0x68] sm:$0xff] %v222
                %v224 = vld [vmem:[%s194 + $0x70] sm:$0xff]
                %225 = vst [vmem:[%s195 + $0x70] sm:$0xff] %v224
                %v226 = vld [vmem:[%s194 + $0x78] sm:$0xff]
                %227 = vst [vmem:[%s195 + $0x78] sm:$0xff] %v226
              $region57: #{graphnet_forward.1} parent=51 // loop_footer
                %s193 = sadd.s32 1, %s189
              $region58: #{graphnet_forward.1} parent=51 // loop_footer_branch
                %188 = sbr.rel target = $region54
              $region59: #{graphnet_forward.1} parent=51 // loop_exit
                _
            $region52: #{graphnet_forward.1} parent=36 // pred_fallthru
              _
            %p228 = pneg %p184
            // Predicated region
            $region60: #{graphnet_forward.1} parent=36 // pred_check
              _
            $region61: #{graphnet_forward.1} parent=36 // pred_check_branch
              %230 = sbr.rel (%p184) target = $region63
            $region62: #{graphnet_forward.1} parent=36 // pred_region
              %s231 = sand.u32 128, 7
            $region63: #{graphnet_forward.1} parent=36 // pred_fallthru
              _
          $region37: #{graphnet_forward.1} parent=33 // pred_fallthru
            _
          // Predicated region
          $region38: #{graphnet_forward.1} parent=33 // pred_check
            %p169 = pneg %p165
          $region39: #{graphnet_forward.1} parent=33 // pred_check_branch
            %171 = sbr.rel (%p169) target = $region41
          $region40: #{graphnet_forward.1} parent=33 // pred_region
            %s172 = sshllo.u32 0, 128
            loop: start=0, step=1, limit=1
            $region42: #{graphnet_forward.1} parent=40 // loop_pre_header
              _
            $region43: #{graphnet_forward.1} parent=40 // loop_header
              %s174 = sphi 0, %s178
              %p175 = scmp.ge.s32.totalorder %s174, 1
              %s179 = sphi %s1, %s1
              %s180 = sphi [#allocation3], [#allocation3]
            $region44: #{graphnet_forward.1} parent=40 // loop_header_branch
              %177 = sbr.rel (%p175) target = $region48
            $region45: #{graphnet_forward.1} parent=40 // loop_body
              %v181 = vld [vmem:[%s179] sm:%s172]
              %182 = vst [vmem:[%s180] sm:%s172] %v181
            $region46: #{graphnet_forward.1} parent=40 // loop_footer
              %s178 = sadd.s32 1, %s174
            $region47: #{graphnet_forward.1} parent=40 // loop_footer_branch
              %173 = sbr.rel target = $region43
            $region48: #{graphnet_forward.1} parent=40 // loop_exit
              _
          $region41: #{graphnet_forward.1} parent=33 // pred_fallthru
            _
          // Predicated region
          $region64: #{graphnet_forward.1} parent=33 // pred_check
            _
          $region65: #{graphnet_forward.1} parent=33 // pred_check_branch
            %234 = sbr.rel (0) target = $region67
          $region66: #{graphnet_forward.1} parent=33 // pred_region
            %235 = vsyncadd [#allocation5], 2048
          $region67: #{graphnet_forward.1} parent=33 // pred_fallthru
            _
          %s236 = smul.u32 4, 32
          %s237 = smul.u32 %s236, 1
          %s238 = sshll.u32 %s237, 4
          %239 = dma.done [#allocation5], %s238
        $region68: #{graphnet_forward.1} parent=31
          #allocation7 [shape = 's32[1]{0}', space=sflag, size = 0x4, scoped, tag = 'scoped memory for graphnet_forward.1']
          %p241 = scmp.lt.u32.totalorder 4, 8
          %p242 = pneg %p241
          // Predicated region
          $region69: #{graphnet_forward.1} parent=68 // pred_check
            _
          $region70: #{graphnet_forward.1} parent=68 // pred_check_branch
            %244 = sbr.rel (%p241) target = $region72
          $region71: #{graphnet_forward.1} parent=68 // pred_region
            %s385 = sand.u32 4, 7
            %p386 = scmp.eq.s32.totalorder %s385, 0
            %p387 = pneg %p386
            // Predicated region
            $region84: #{graphnet_forward.1} parent=71 // pred_check
              _
            $region85: #{graphnet_forward.1} parent=71 // pred_check_branch
              %389 = sbr.rel (%p386) target = $region87
            $region86: #{graphnet_forward.1} parent=71 // pred_region
              %s390 = sand.u32 4, 7
              %s391 = ssub.s32 4, %s390
              %s392 = scalar_lea.vmem %s0, %s391
              %s393 = ssub.s32 4, %s390
              %s394 = scalar_lea.vmem [#allocation2], %s393
              loop: start=0, step=1, limit=1
              $region88: #{graphnet_forward.1} parent=86 // loop_pre_header
                _
              $region89: #{graphnet_forward.1} parent=86 // loop_header
                %s396 = sphi 0, %s400
                %p397 = scmp.ge.s32.totalorder %s396, 1
                %s401 = sphi %s0, %s0
                %s402 = sphi [#allocation2], [#allocation2]
              $region90: #{graphnet_forward.1} parent=86 // loop_header_branch
                %399 = sbr.rel (%p397) target = $region94
              $region91: #{graphnet_forward.1} parent=86 // loop_body
                _
              $region92: #{graphnet_forward.1} parent=86 // loop_footer
                %s400 = sadd.s32 1, %s396
              $region93: #{graphnet_forward.1} parent=86 // loop_footer_branch
                %395 = sbr.rel target = $region89
              $region94: #{graphnet_forward.1} parent=86 // loop_exit
                _
              %s403 = sshllo.u32 0, %s390
              loop: start=0, step=1, limit=1
              $region95: #{graphnet_forward.1} parent=86 // loop_pre_header
                _
              $region96: #{graphnet_forward.1} parent=86 // loop_header
                %s405 = sphi 0, %s409
                %p406 = scmp.ge.s32.totalorder %s405, 1
                %s410 = sphi %s392, %s392
                %s411 = sphi %s394, %s394
              $region97: #{graphnet_forward.1} parent=86 // loop_header_branch
                %408 = sbr.rel (%p406) target = $region101
              $region98: #{graphnet_forward.1} parent=86 // loop_body
                %v412 = vld [vmem:[%s410] sm:%s403]
                %413 = vst [vmem:[%s411] sm:%s403] %v412
                %v414 = vld [vmem:[%s410 + $0x8] sm:%s403]
                %415 = vst [vmem:[%s411 + $0x4] sm:%s403] %v414
                %v416 = vld [vmem:[%s410 + $0x4] sm:%s403]
                %417 = vst [vmem:[%s411 + $0x8] sm:%s403] %v416
                %v418 = vld [vmem:[%s410 + $0xc] sm:%s403]
                %419 = vst [vmem:[%s411 + $0xc] sm:%s403] %v418
                %v420 = vld [vmem:[%s410 + $0x10] sm:%s403]
                %421 = vst [vmem:[%s411 + $0x10] sm:%s403] %v420
                %v422 = vld [vmem:[%s410 + $0x18] sm:%s403]
                %423 = vst [vmem:[%s411 + $0x14] sm:%s403] %v422
                %v424 = vld [vmem:[%s410 + $0x14] sm:%s403]
                %425 = vst [vmem:[%s411 + $0x18] sm:%s403] %v424
                %v426 = vld [vmem:[%s410 + $0x1c] sm:%s403]
                %427 = vst [vmem:[%s411 + $0x1c] sm:%s403] %v426
                %v428 = vld [vmem:[%s410 + $0x20] sm:%s403]
                %429 = vst [vmem:[%s411 + $0x20] sm:%s403] %v428
                %v430 = vld [vmem:[%s410 + $0x28] sm:%s403]
                %431 = vst [vmem:[%s411 + $0x24] sm:%s403] %v430
                %v432 = vld [vmem:[%s410 + $0x24] sm:%s403]
                %433 = vst [vmem:[%s411 + $0x28] sm:%s403] %v432
                %v434 = vld [vmem:[%s410 + $0x2c] sm:%s403]
                %435 = vst [vmem:[%s411 + $0x2c] sm:%s403] %v434
                %v436 = vld [vmem:[%s410 + $0x30] sm:%s403]
                %437 = vst [vmem:[%s411 + $0x30] sm:%s403] %v436
                %v438 = vld [vmem:[%s410 + $0x38] sm:%s403]
                %439 = vst [vmem:[%s411 + $0x34] sm:%s403] %v438
                %v440 = vld [vmem:[%s410 + $0x34] sm:%s403]
                %441 = vst [vmem:[%s411 + $0x38] sm:%s403] %v440
                %v442 = vld [vmem:[%s410 + $0x3c] sm:%s403]
                %443 = vst [vmem:[%s411 + $0x3c] sm:%s403] %v442
                %v444 = vld [vmem:[%s410 + $0x40] sm:%s403]
                %445 = vst [vmem:[%s411 + $0x40] sm:%s403] %v444
                %v446 = vld [vmem:[%s410 + $0x48] sm:%s403]
                %447 = vst [vmem:[%s411 + $0x44] sm:%s403] %v446
                %v448 = vld [vmem:[%s410 + $0x44] sm:%s403]
                %449 = vst [vmem:[%s411 + $0x48] sm:%s403] %v448
                %v450 = vld [vmem:[%s410 + $0x4c] sm:%s403]
                %451 = vst [vmem:[%s411 + $0x4c] sm:%s403] %v450
                %v452 = vld [vmem:[%s410 + $0x50] sm:%s403]
                %453 = vst [vmem:[%s411 + $0x50] sm:%s403] %v452
                %v454 = vld [vmem:[%s410 + $0x58] sm:%s403]
                %455 = vst [vmem:[%s411 + $0x54] sm:%s403] %v454
                %v456 = vld [vmem:[%s410 + $0x54] sm:%s403]
                %457 = vst [vmem:[%s411 + $0x58] sm:%s403] %v456
                %v458 = vld [vmem:[%s410 + $0x5c] sm:%s403]
                %459 = vst [vmem:[%s411 + $0x5c] sm:%s403] %v458
                %v460 = vld [vmem:[%s410 + $0x60] sm:%s403]
                %461 = vst [vmem:[%s411 + $0x60] sm:%s403] %v460
                %v462 = vld [vmem:[%s410 + $0x68] sm:%s403]
                %463 = vst [vmem:[%s411 + $0x64] sm:%s403] %v462
                %v464 = vld [vmem:[%s410 + $0x64] sm:%s403]
                %465 = vst [vmem:[%s411 + $0x68] sm:%s403] %v464
                %v466 = vld [vmem:[%s410 + $0x6c] sm:%s403]
                %467 = vst [vmem:[%s411 + $0x6c] sm:%s403] %v466
                %v468 = vld [vmem:[%s410 + $0x70] sm:%s403]
                %469 = vst [vmem:[%s411 + $0x70] sm:%s403] %v468
                %v470 = vld [vmem:[%s410 + $0x78] sm:%s403]
                %471 = vst [vmem:[%s411 + $0x74] sm:%s403] %v470
                %v472 = vld [vmem:[%s410 + $0x74] sm:%s403]
                %473 = vst [vmem:[%s411 + $0x78] sm:%s403] %v472
                %v474 = vld [vmem:[%s410 + $0x7c] sm:%s403]
                %475 = vst [vmem:[%s411 + $0x7c] sm:%s403] %v474
                %v476 = vld [vmem:[%s410 + $0x80] sm:%s403]
                %477 = vst [vmem:[%s411 + $0x80] sm:%s403] %v476
                %v478 = vld [vmem:[%s410 + $0x88] sm:%s403]
                %479 = vst [vmem:[%s411 + $0x84] sm:%s403] %v478
                %v480 = vld [vmem:[%s410 + $0x84] sm:%s403]
                %481 = vst [vmem:[%s411 + $0x88] sm:%s403] %v480
                %v482 = vld [vmem:[%s410 + $0x8c] sm:%s403]
                %483 = vst [vmem:[%s411 + $0x8c] sm:%s403] %v482
                %v484 = vld [vmem:[%s410 + $0x90] sm:%s403]
                %485 = vst [vmem:[%s411 + $0x90] sm:%s403] %v484
                %v486 = vld [vmem:[%s410 + $0x98] sm:%s403]
                %487 = vst [vmem:[%s411 + $0x94] sm:%s403] %v486
                %v488 = vld [vmem:[%s410 + $0x94] sm:%s403]
                %489 = vst [vmem:[%s411 + $0x98] sm:%s403] %v488
                %v490 = vld [vmem:[%s410 + $0x9c] sm:%s403]
                %491 = vst [vmem:[%s411 + $0x9c] sm:%s403] %v490
                %v492 = vld [vmem:[%s410 + $0xa0] sm:%s403]
                %493 = vst [vmem:[%s411 + $0xa0] sm:%s403] %v492
                %v494 = vld [vmem:[%s410 + $0xa8] sm:%s403]
                %495 = vst [vmem:[%s411 + $0xa4] sm:%s403] %v494
                %v496 = vld [vmem:[%s410 + $0xa4] sm:%s403]
                %497 = vst [vmem:[%s411 + $0xa8] sm:%s403] %v496
                %v498 = vld [vmem:[%s410 + $0xac] sm:%s403]
                %499 = vst [vmem:[%s411 + $0xac] sm:%s403] %v498
                %v500 = vld [vmem:[%s410 + $0xb0] sm:%s403]
                %501 = vst [vmem:[%s411 + $0xb0] sm:%s403] %v500
                %v502 = vld [vmem:[%s410 + $0xb8] sm:%s403]
                %503 = vst [vmem:[%s411 + $0xb4] sm:%s403] %v502
                %v504 = vld [vmem:[%s410 + $0xb4] sm:%s403]
                %505 = vst [vmem:[%s411 + $0xb8] sm:%s403] %v504
                %v506 = vld [vmem:[%s410 + $0xbc] sm:%s403]
                %507 = vst [vmem:[%s411 + $0xbc] sm:%s403] %v506
                %v508 = vld [vmem:[%s410 + $0xc0] sm:%s403]
                %509 = vst [vmem:[%s411 + $0xc0] sm:%s403] %v508
                %v510 = vld [vmem:[%s410 + $0xc8] sm:%s403]
                %511 = vst [vmem:[%s411 + $0xc4] sm:%s403] %v510
                %v512 = vld [vmem:[%s410 + $0xc4] sm:%s403]
                %513 = vst [vmem:[%s411 + $0xc8] sm:%s403] %v512
                %v514 = vld [vmem:[%s410 + $0xcc] sm:%s403]
                %515 = vst [vmem:[%s411 + $0xcc] sm:%s403] %v514
                %v516 = vld [vmem:[%s410 + $0xd0] sm:%s403]
                %517 = vst [vmem:[%s411 + $0xd0] sm:%s403] %v516
                %v518 = vld [vmem:[%s410 + $0xd8] sm:%s403]
                %519 = vst [vmem:[%s411 + $0xd4] sm:%s403] %v518
                %v520 = vld [vmem:[%s410 + $0xd4] sm:%s403]
                %521 = vst [vmem:[%s411 + $0xd8] sm:%s403] %v520
                %v522 = vld [vmem:[%s410 + $0xdc] sm:%s403]
                %523 = vst [vmem:[%s411 + $0xdc] sm:%s403] %v522
                %v524 = vld [vmem:[%s410 + $0xe0] sm:%s403]
                %525 = vst [vmem:[%s411 + $0xe0] sm:%s403] %v524
                %v526 = vld [vmem:[%s410 + $0xe8] sm:%s403]
                %527 = vst [vmem:[%s411 + $0xe4] sm:%s403] %v526
                %v528 = vld [vmem:[%s410 + $0xe4] sm:%s403]
                %529 = vst [vmem:[%s411 + $0xe8] sm:%s403] %v528
                %v530 = vld [vmem:[%s410 + $0xec] sm:%s403]
                %531 = vst [vmem:[%s411 + $0xec] sm:%s403] %v530
                %v532 = vld [vmem:[%s410 + $0xf0] sm:%s403]
                %533 = vst [vmem:[%s411 + $0xf0] sm:%s403] %v532
                %v534 = vld [vmem:[%s410 + $0xf8] sm:%s403]
                %535 = vst [vmem:[%s411 + $0xf4] sm:%s403] %v534
                %v536 = vld [vmem:[%s410 + $0xf4] sm:%s403]
                %537 = vst [vmem:[%s411 + $0xf8] sm:%s403] %v536
                %v538 = vld [vmem:[%s410 + $0xfc] sm:%s403]
                %539 = vst [vmem:[%s411 + $0xfc] sm:%s403] %v538
              $region99: #{graphnet_forward.1} parent=86 // loop_footer
                %s409 = sadd.s32 1, %s405
              $region100: #{graphnet_forward.1} parent=86 // loop_footer_branch
                %404 = sbr.rel target = $region96
              $region101: #{graphnet_forward.1} parent=86 // loop_exit
                _
            $region87: #{graphnet_forward.1} parent=71 // pred_fallthru
              _
          $region72: #{graphnet_forward.1} parent=68 // pred_fallthru
            _
          // Predicated region
          $region73: #{graphnet_forward.1} parent=68 // pred_check
            %p245 = pneg %p241
          $region74: #{graphnet_forward.1} parent=68 // pred_check_branch
            %247 = sbr.rel (%p245) target = $region76
          $region75: #{graphnet_forward.1} parent=68 // pred_region
            %s248 = sshllo.u32 0, 4
            loop: start=0, step=1, limit=1
            $region77: #{graphnet_forward.1} parent=75 // loop_pre_header
              _
            $region78: #{graphnet_forward.1} parent=75 // loop_header
              %s250 = sphi 0, %s254
              %p251 = scmp.ge.s32.totalorder %s250, 1
              %s255 = sphi %s0, %s0
              %s256 = sphi [#allocation2], [#allocation2]
            $region79: #{graphnet_forward.1} parent=75 // loop_header_branch
              %253 = sbr.rel (%p251) target = $region83
            $region80: #{graphnet_forward.1} parent=75 // loop_body
              %v257 = vld [vmem:[%s255] sm:%s248]
              %258 = vst [vmem:[%s256] sm:%s248] %v257
              %v259 = vld [vmem:[%s255 + $0x8] sm:%s248]
              %260 = vst [vmem:[%s256 + $0x4] sm:%s248] %v259
              %v261 = vld [vmem:[%s255 + $0x4] sm:%s248]
              %262 = vst [vmem:[%s256 + $0x8] sm:%s248] %v261
              %v263 = vld [vmem:[%s255 + $0xc] sm:%s248]
              %264 = vst [vmem:[%s256 + $0xc] sm:%s248] %v263
              %v265 = vld [vmem:[%s255 + $0x10] sm:%s248]
              %266 = vst [vmem:[%s256 + $0x10] sm:%s248] %v265
              %v267 = vld [vmem:[%s255 + $0x18] sm:%s248]
              %268 = vst [vmem:[%s256 + $0x14] sm:%s248] %v267
              %v269 = vld [vmem:[%s255 + $0x14] sm:%s248]
              %270 = vst [vmem:[%s256 + $0x18] sm:%s248] %v269
              %v271 = vld [vmem:[%s255 + $0x1c] sm:%s248]
              %272 = vst [vmem:[%s256 + $0x1c] sm:%s248] %v271
              %v273 = vld [vmem:[%s255 + $0x20] sm:%s248]
              %274 = vst [vmem:[%s256 + $0x20] sm:%s248] %v273
              %v275 = vld [vmem:[%s255 + $0x28] sm:%s248]
              %276 = vst [vmem:[%s256 + $0x24] sm:%s248] %v275
              %v277 = vld [vmem:[%s255 + $0x24] sm:%s248]
              %278 = vst [vmem:[%s256 + $0x28] sm:%s248] %v277
              %v279 = vld [vmem:[%s255 + $0x2c] sm:%s248]
              %280 = vst [vmem:[%s256 + $0x2c] sm:%s248] %v279
              %v281 = vld [vmem:[%s255 + $0x30] sm:%s248]
              %282 = vst [vmem:[%s256 + $0x30] sm:%s248] %v281
              %v283 = vld [vmem:[%s255 + $0x38] sm:%s248]
              %284 = vst [vmem:[%s256 + $0x34] sm:%s248] %v283
              %v285 = vld [vmem:[%s255 + $0x34] sm:%s248]
              %286 = vst [vmem:[%s256 + $0x38] sm:%s248] %v285
              %v287 = vld [vmem:[%s255 + $0x3c] sm:%s248]
              %288 = vst [vmem:[%s256 + $0x3c] sm:%s248] %v287
              %v289 = vld [vmem:[%s255 + $0x40] sm:%s248]
              %290 = vst [vmem:[%s256 + $0x40] sm:%s248] %v289
              %v291 = vld [vmem:[%s255 + $0x48] sm:%s248]
              %292 = vst [vmem:[%s256 + $0x44] sm:%s248] %v291
              %v293 = vld [vmem:[%s255 + $0x44] sm:%s248]
              %294 = vst [vmem:[%s256 + $0x48] sm:%s248] %v293
              %v295 = vld [vmem:[%s255 + $0x4c] sm:%s248]
              %296 = vst [vmem:[%s256 + $0x4c] sm:%s248] %v295
              %v297 = vld [vmem:[%s255 + $0x50] sm:%s248]
              %298 = vst [vmem:[%s256 + $0x50] sm:%s248] %v297
              %v299 = vld [vmem:[%s255 + $0x58] sm:%s248]
              %300 = vst [vmem:[%s256 + $0x54] sm:%s248] %v299
              %v301 = vld [vmem:[%s255 + $0x54] sm:%s248]
              %302 = vst [vmem:[%s256 + $0x58] sm:%s248] %v301
              %v303 = vld [vmem:[%s255 + $0x5c] sm:%s248]
              %304 = vst [vmem:[%s256 + $0x5c] sm:%s248] %v303
              %v305 = vld [vmem:[%s255 + $0x60] sm:%s248]
              %306 = vst [vmem:[%s256 + $0x60] sm:%s248] %v305
              %v307 = vld [vmem:[%s255 + $0x68] sm:%s248]
              %308 = vst [vmem:[%s256 + $0x64] sm:%s248] %v307
              %v309 = vld [vmem:[%s255 + $0x64] sm:%s248]
              %310 = vst [vmem:[%s256 + $0x68] sm:%s248] %v309
              %v311 = vld [vmem:[%s255 + $0x6c] sm:%s248]
              %312 = vst [vmem:[%s256 + $0x6c] sm:%s248] %v311
              %v313 = vld [vmem:[%s255 + $0x70] sm:%s248]
              %314 = vst [vmem:[%s256 + $0x70] sm:%s248] %v313
              %v315 = vld [vmem:[%s255 + $0x78] sm:%s248]
              %316 = vst [vmem:[%s256 + $0x74] sm:%s248] %v315
              %v317 = vld [vmem:[%s255 + $0x74] sm:%s248]
              %318 = vst [vmem:[%s256 + $0x78] sm:%s248] %v317
              %v319 = vld [vmem:[%s255 + $0x7c] sm:%s248]
              %320 = vst [vmem:[%s256 + $0x7c] sm:%s248] %v319
              %v321 = vld [vmem:[%s255 + $0x80] sm:%s248]
              %322 = vst [vmem:[%s256 + $0x80] sm:%s248] %v321
              %v323 = vld [vmem:[%s255 + $0x88] sm:%s248]
              %324 = vst [vmem:[%s256 + $0x84] sm:%s248] %v323
              %v325 = vld [vmem:[%s255 + $0x84] sm:%s248]
              %326 = vst [vmem:[%s256 + $0x88] sm:%s248] %v325
              %v327 = vld [vmem:[%s255 + $0x8c] sm:%s248]
              %328 = vst [vmem:[%s256 + $0x8c] sm:%s248] %v327
              %v329 = vld [vmem:[%s255 + $0x90] sm:%s248]
              %330 = vst [vmem:[%s256 + $0x90] sm:%s248] %v329
              %v331 = vld [vmem:[%s255 + $0x98] sm:%s248]
              %332 = vst [vmem:[%s256 + $0x94] sm:%s248] %v331
              %v333 = vld [vmem:[%s255 + $0x94] sm:%s248]
              %334 = vst [vmem:[%s256 + $0x98] sm:%s248] %v333
              %v335 = vld [vmem:[%s255 + $0x9c] sm:%s248]
              %336 = vst [vmem:[%s256 + $0x9c] sm:%s248] %v335
              %v337 = vld [vmem:[%s255 + $0xa0] sm:%s248]
              %338 = vst [vmem:[%s256 + $0xa0] sm:%s248] %v337
              %v339 = vld [vmem:[%s255 + $0xa8] sm:%s248]
              %340 = vst [vmem:[%s256 + $0xa4] sm:%s248] %v339
              %v341 = vld [vmem:[%s255 + $0xa4] sm:%s248]
              %342 = vst [vmem:[%s256 + $0xa8] sm:%s248] %v341
              %v343 = vld [vmem:[%s255 + $0xac] sm:%s248]
              %344 = vst [vmem:[%s256 + $0xac] sm:%s248] %v343
              %v345 = vld [vmem:[%s255 + $0xb0] sm:%s248]
              %346 = vst [vmem:[%s256 + $0xb0] sm:%s248] %v345
              %v347 = vld [vmem:[%s255 + $0xb8] sm:%s248]
              %348 = vst [vmem:[%s256 + $0xb4] sm:%s248] %v347
              %v349 = vld [vmem:[%s255 + $0xb4] sm:%s248]
              %350 = vst [vmem:[%s256 + $0xb8] sm:%s248] %v349
              %v351 = vld [vmem:[%s255 + $0xbc] sm:%s248]
              %352 = vst [vmem:[%s256 + $0xbc] sm:%s248] %v351
              %v353 = vld [vmem:[%s255 + $0xc0] sm:%s248]
              %354 = vst [vmem:[%s256 + $0xc0] sm:%s248] %v353
              %v355 = vld [vmem:[%s255 + $0xc8] sm:%s248]
              %356 = vst [vmem:[%s256 + $0xc4] sm:%s248] %v355
              %v357 = vld [vmem:[%s255 + $0xc4] sm:%s248]
              %358 = vst [vmem:[%s256 + $0xc8] sm:%s248] %v357
              %v359 = vld [vmem:[%s255 + $0xcc] sm:%s248]
              %360 = vst [vmem:[%s256 + $0xcc] sm:%s248] %v359
              %v361 = vld [vmem:[%s255 + $0xd0] sm:%s248]
              %362 = vst [vmem:[%s256 + $0xd0] sm:%s248] %v361
              %v363 = vld [vmem:[%s255 + $0xd8] sm:%s248]
              %364 = vst [vmem:[%s256 + $0xd4] sm:%s248] %v363
              %v365 = vld [vmem:[%s255 + $0xd4] sm:%s248]
              %366 = vst [vmem:[%s256 + $0xd8] sm:%s248] %v365
              %v367 = vld [vmem:[%s255 + $0xdc] sm:%s248]
              %368 = vst [vmem:[%s256 + $0xdc] sm:%s248] %v367
              %v369 = vld [vmem:[%s255 + $0xe0] sm:%s248]
              %370 = vst [vmem:[%s256 + $0xe0] sm:%s248] %v369
              %v371 = vld [vmem:[%s255 + $0xe8] sm:%s248]
              %372 = vst [vmem:[%s256 + $0xe4] sm:%s248] %v371
              %v373 = vld [vmem:[%s255 + $0xe4] sm:%s248]
              %374 = vst [vmem:[%s256 + $0xe8] sm:%s248] %v373
              %v375 = vld [vmem:[%s255 + $0xec] sm:%s248]
              %376 = vst [vmem:[%s256 + $0xec] sm:%s248] %v375
              %v377 = vld [vmem:[%s255 + $0xf0] sm:%s248]
              %378 = vst [vmem:[%s256 + $0xf0] sm:%s248] %v377
              %v379 = vld [vmem:[%s255 + $0xf8] sm:%s248]
              %380 = vst [vmem:[%s256 + $0xf4] sm:%s248] %v379
              %v381 = vld [vmem:[%s255 + $0xf4] sm:%s248]
              %382 = vst [vmem:[%s256 + $0xf8] sm:%s248] %v381
              %v383 = vld [vmem:[%s255 + $0xfc] sm:%s248]
              %384 = vst [vmem:[%s256 + $0xfc] sm:%s248] %v383
            $region81: #{graphnet_forward.1} parent=75 // loop_footer
              %s254 = sadd.s32 1, %s250
            $region82: #{graphnet_forward.1} parent=75 // loop_footer_branch
              %249 = sbr.rel target = $region78
            $region83: #{graphnet_forward.1} parent=75 // loop_exit
              _
          $region76: #{graphnet_forward.1} parent=68 // pred_fallthru
            _
          // Predicated region
          $region102: #{graphnet_forward.1} parent=68 // pred_check
            _
          $region103: #{graphnet_forward.1} parent=68 // pred_check_branch
            %542 = sbr.rel (0) target = $region105
          $region104: #{graphnet_forward.1} parent=68 // pred_region
            %543 = vsyncadd [#allocation7], 4096
          $region105: #{graphnet_forward.1} parent=68 // pred_fallthru
            _
          %s544 = smul.u32 4, 32
          %s545 = smul.u32 %s544, 2
          %s546 = sshll.u32 %s545, 4
          %547 = dma.done [#allocation7], %s546
      $region32: #{graphnet_forward.1} parent=27 // pred_fallthru
        _
      %p548 = scmp.lt.s32.totalorder %s19, 0
      %s549 = ssub.s32 0, %s19
      %s550 = scalar_select %p548, %s549, %s19
      %s551 = sand.u32 %s550, 1
      %s552 = ssub.s32 0, %s551
      %s553 = scalar_select %p548, %s552, %s551
      %p554 = scmp.ne.s32.totalorder %s553, 0
      %p555 = scmp.lt.s32.totalorder %s553, 0
      %p556 = pnand %p555, %p554
      %p557 = pneg %p556
      %s558 = sadd.s32 %s553, 2
      %s559 = scalar_select %p557, %s558, %s553
      // Predicated region
      $region106: #{graphnet_forward.1} parent=27 // pred_check
        %p560 = pneg %p159
      $region107: #{graphnet_forward.1} parent=27 // pred_check_branch
        %562 = sbr.rel (%p560) target = $region109
      $region108: #{graphnet_forward.1} parent=27 // pred_region
        %s563 = smul.u32 %s559, 16
        %s564 = smul.addr %s563, 8
        %s565 = scalar_lea.vmem [#allocation3], %s564
        %v566 = vld [vmem:[%s565] sm:$0xff]
        %v567 = vld [vmem:[%s565 + $0x8] sm:$0xff]
        %v568 = vld [vmem:[%s565 + $0x10] sm:$0xff]
        %v569 = vld [vmem:[%s565 + $0x18] sm:$0xff]
        %v570 = vld [vmem:[%s565 + $0x20] sm:$0xff]
        %v571 = vld [vmem:[%s565 + $0x28] sm:$0xff]
        %v572 = vld [vmem:[%s565 + $0x30] sm:$0xff]
        %v573 = vld [vmem:[%s565 + $0x38] sm:$0xff]
        %v574 = vld [vmem:[%s565 + $0x40] sm:$0xff]
        %v575 = vld [vmem:[%s565 + $0x48] sm:$0xff]
        %v576 = vld [vmem:[%s565 + $0x50] sm:$0xff]
        %v577 = vld [vmem:[%s565 + $0x58] sm:$0xff]
        %v578 = vld [vmem:[%s565 + $0x60] sm:$0xff]
        %v579 = vld [vmem:[%s565 + $0x68] sm:$0xff]
        %v580 = vld [vmem:[%s565 + $0x70] sm:$0xff]
        %v581 = vld [vmem:[%s565 + $0x78] sm:$0xff]
        %v582 = vld [vmem:[%s153] sm:$0xf]
        %v583 = vld [vmem:[%s153 + $0x4] sm:$0xf]
        %v584 = vld [vmem:[%s153 + $0x8] sm:$0xf]
        %v585 = vld [vmem:[%s153 + $0xc] sm:$0xf]
        %v586 = vld [vmem:[%s153 + $0x10] sm:$0xf]
        %v587 = vld [vmem:[%s153 + $0x14] sm:$0xf]
        %v588 = vld [vmem:[%s153 + $0x18] sm:$0xf]
        %v589 = vld [vmem:[%s153 + $0x1c] sm:$0xf]
        %v590 = vld [vmem:[%s153 + $0x20] sm:$0xf]
        %v591 = vld [vmem:[%s153 + $0x24] sm:$0xf]
        %v592 = vld [vmem:[%s153 + $0x28] sm:$0xf]
        %v593 = vld [vmem:[%s153 + $0x2c] sm:$0xf]
        %v594 = vld [vmem:[%s153 + $0x30] sm:$0xf]
        %v595 = vld [vmem:[%s153 + $0x34] sm:$0xf]
        %v596 = vld [vmem:[%s153 + $0x38] sm:$0xf]
        %v597 = vld [vmem:[%s153 + $0x3c] sm:$0xf]
        %v614 = vunpack.c.l.b16 %v582
        %v615 = vunpack.c.l.b16 %v583
        %v616 = vunpack.c.l.b16 %v584
        %v617 = vunpack.c.l.b16 %v585
        %v618 = vunpack.c.l.b16 %v586
        %v619 = vunpack.c.l.b16 %v587
        %v620 = vunpack.c.l.b16 %v588
        %v621 = vunpack.c.l.b16 %v589
        %v622 = vunpack.c.l.b16 %v590
        %v623 = vunpack.c.l.b16 %v591
        %v624 = vunpack.c.l.b16 %v592
        %v625 = vunpack.c.l.b16 %v593
        %v626 = vunpack.c.l.b16 %v594
        %v627 = vunpack.c.l.b16 %v595
        %v628 = vunpack.c.l.b16 %v596
        %v629 = vunpack.c.l.b16 %v597
        %v630 = vpack.c.b16 %v615, %v614
        %v631 = vpack.c.b16 %v617, %v616
        %v632 = vpack.c.b16 %v619, %v618
        %v633 = vpack.c.b16 %v621, %v620
        %v634 = vpack.c.b16 %v623, %v622
        %v635 = vpack.c.b16 %v625, %v624
        %v636 = vpack.c.b16 %v627, %v626
        %v637 = vpack.c.b16 %v629, %v628
        %646 = vmatprep.subr.bf16.mxu0 0
        %647 = vmatpush1.bf16.msra.mxu0 %v630
        %648 = vmatprep.subr.bf16.mxu0 0
        %649 = vmatpush1.bf16.msra.mxu0 %v631
        %650 = vmatprep.subr.bf16.mxu0 0
        %651 = vmatpush1.bf16.msra.mxu0 %v632
        %652 = vmatprep.subr.bf16.mxu0 0
        %653 = vmatpush1.bf16.msra.mxu0 %v633
        %654 = vmatprep.subr.bf16.mxu0 0
        %655 = vmatpush1.bf16.msra.mxu0 %v634
        %656 = vmatprep.subr.bf16.mxu0 0
        %657 = vmatpush1.bf16.msra.mxu0 %v635
        %658 = vmatprep.subr.bf16.mxu0 0
        %659 = vmatpush1.bf16.msra.mxu0 %v636
        %660 = vmatprep.subr.bf16.mxu0 0
        %661 = vmatpush1.bf16.msra.mxu0 %v637
        %662 = vmatprep.subr.bf16.mxu0 0
        %663 = vmatpush1.bf16.msra.mxu0 0
        %664 = vmatprep.subr.bf16.mxu0 0
        %665 = vmatpush1.bf16.msra.mxu0 0
        %666 = vmatprep.subr.bf16.mxu0 0
        %667 = vmatpush1.bf16.msra.mxu0 0
        %668 = vmatprep.subr.bf16.mxu0 0
        %669 = vmatpush1.bf16.msra.mxu0 0
        %670 = vmatprep.subr.bf16.mxu0 0
        %671 = vmatpush1.bf16.msra.mxu0 0
        %672 = vmatprep.subr.bf16.mxu0 0
        %673 = vmatpush1.bf16.msra.mxu0 0
        %674 = vmatprep.subr.bf16.mxu0 0
        %675 = vmatpush1.bf16.msra.mxu0 0
        %676 = vmatprep.subr.bf16.mxu0 0
        %677 = vmatpush1.bf16.msra.mxu0 0
        %678 = vmatprep.mubr.bf16.mxu0 0
        %679 = vmatmul.mubr.bf16.gmra.mrb[0].mxu0 %v566
        %v680 = vpop.f32.mrb[0].mxu0
        %v681 = vadd.f32 0.0, %v680
        %v682 = vpop.f32.mrb[0].mxu0
        %v683 = vpop.f32.mrb[0].mxu0
        %v684 = vadd.f32 0.0, %v683
        %v685 = vpop.f32.mrb[0].mxu0
        %686 = vmatprep.mubr.bf16.mxu0 0
        %687 = vmatmul.mubr.bf16.gmra.mrb[0].mxu0 %v567
        %v688 = vpop.f32.mrb[0].mxu0
        %v689 = vadd.f32 0.0, %v688
        %v690 = vpop.f32.mrb[0].mxu0
        %v691 = vpop.f32.mrb[0].mxu0
        %v692 = vadd.f32 0.0, %v691
        %v693 = vpop.f32.mrb[0].mxu0
        %694 = vmatprep.mubr.bf16.mxu0 0
        %695 = vmatmul.mubr.bf16.gmra.mrb[0].mxu0 %v568
        %v696 = vpop.f32.mrb[0].mxu0
        %v697 = vadd.f32 0.0, %v696
        %v698 = vpop.f32.mrb[0].mxu0
        %v699 = vpop.f32.mrb[0].mxu0
        %v700 = vadd.f32 0.0, %v699
        %v701 = vpop.f32.mrb[0].mxu0
        %702 = vmatprep.mubr.bf16.mxu0 0
        %703 = vmatmul.mubr.bf16.gmra.mrb[0].mxu0 %v569
        %v704 = vpop.f32.mrb[0].mxu0
        %v705 = vadd.f32 0.0, %v704
        %v706 = vpop.f32.mrb[0].mxu0
        %v707 = vpop.f32.mrb[0].mxu0
        %v708 = vadd.f32 0.0, %v707
        %v709 = vpop.f32.mrb[0].mxu0
        %710 = vmatprep.mubr.bf16.mxu0 0
        %711 = vmatmul.mubr.bf16.gmra.mrb[0].mxu0 %v570
        %v712 = vpop.f32.mrb[0].mxu0
        %v713 = vadd.f32 0.0, %v712
        %v714 = vpop.f32.mrb[0].mxu0
        %v715 = vpop.f32.mrb[0].mxu0
        %v716 = vadd.f32 0.0, %v715
        %v717 = vpop.f32.mrb[0].mxu0
        %718 = vmatprep.mubr.bf16.mxu0 0
        %719 = vmatmul.mubr.bf16.gmra.mrb[0].mxu0 %v571
        %v720 = vpop.f32.mrb[0].mxu0
        %v721 = vadd.f32 0.0, %v720
        %v722 = vpop.f32.mrb[0].mxu0
        %v723 = vpop.f32.mrb[0].mxu0
        %v724 = vadd.f32 0.0, %v723
        %v725 = vpop.f32.mrb[0].mxu0
        %726 = vmatprep.mubr.bf16.mxu0 0
        %727 = vmatmul.mubr.bf16.gmra.mrb[0].mxu0 %v572
        %v728 = vpop.f32.mrb[0].mxu0
        %v729 = vadd.f32 0.0, %v728
        %v730 = vpop.f32.mrb[0].mxu0
        %v731 = vpop.f32.mrb[0].mxu0
        %v732 = vadd.f32 0.0, %v731
        %v733 = vpop.f32.mrb[0].mxu0
        %734 = vmatprep.mubr.bf16.mxu0 0
        %735 = vmatmul.mubr.bf16.gmra.mrb[0].mxu0 %v573
        %v736 = vpop.f32.mrb[0].mxu0
        %v737 = vadd.f32 0.0, %v736
        %v738 = vpop.f32.mrb[0].mxu0
        %v739 = vpop.f32.mrb[0].mxu0
        %v740 = vadd.f32 0.0, %v739
        %v741 = vpop.f32.mrb[0].mxu0
        %742 = vmatprep.mubr.bf16.mxu0 0
        %743 = vmatmul.mubr.bf16.gmra.mrb[0].mxu0 %v574
        %v744 = vpop.f32.mrb[0].mxu0
        %v745 = vadd.f32 0.0, %v744
        %v746 = vpop.f32.mrb[0].mxu0
        %v747 = vpop.f32.mrb[0].mxu0
        %v748 = vadd.f32 0.0, %v747
        %v749 = vpop.f32.mrb[0].mxu0
        %750 = vmatprep.mubr.bf16.mxu0 0
        %751 = vmatmul.mubr.bf16.gmra.mrb[0].mxu0 %v575
        %v752 = vpop.f32.mrb[0].mxu0
        %v753 = vadd.f32 0.0, %v752
        %v754 = vpop.f32.mrb[0].mxu0
        %v755 = vpop.f32.mrb[0].mxu0
        %v756 = vadd.f32 0.0, %v755
        %v757 = vpop.f32.mrb[0].mxu0
        %758 = vmatprep.mubr.bf16.mxu0 0
        %759 = vmatmul.mubr.bf16.gmra.mrb[0].mxu0 %v576
        %v760 = vpop.f32.mrb[0].mxu0
        %v761 = vadd.f32 0.0, %v760
        %v762 = vpop.f32.mrb[0].mxu0
        %v763 = vpop.f32.mrb[0].mxu0
        %v764 = vadd.f32 0.0, %v763
        %v765 = vpop.f32.mrb[0].mxu0
        %766 = vmatprep.mubr.bf16.mxu0 0
        %767 = vmatmul.mubr.bf16.gmra.mrb[0].mxu0 %v577
        %v768 = vpop.f32.mrb[0].mxu0
        %v769 = vadd.f32 0.0, %v768
        %v770 = vpop.f32.mrb[0].mxu0
        %v771 = vpop.f32.mrb[0].mxu0
        %v772 = vadd.f32 0.0, %v771
        %v773 = vpop.f32.mrb[0].mxu0
        %774 = vmatprep.mubr.bf16.mxu0 0
        %775 = vmatmul.mubr.bf16.gmra.mrb[0].mxu0 %v578
        %v776 = vpop.f32.mrb[0].mxu0
        %v777 = vadd.f32 0.0, %v776
        %v778 = vpop.f32.mrb[0].mxu0
        %v779 = vpop.f32.mrb[0].mxu0
        %v780 = vadd.f32 0.0, %v779
        %v781 = vpop.f32.mrb[0].mxu0
        %782 = vmatprep.mubr.bf16.mxu0 0
        %783 = vmatmul.mubr.bf16.gmra.mrb[0].mxu0 %v579
        %v784 = vpop.f32.mrb[0].mxu0
        %v785 = vadd.f32 0.0, %v784
        %v786 = vpop.f32.mrb[0].mxu0
        %v787 = vpop.f32.mrb[0].mxu0
        %v788 = vadd.f32 0.0, %v787
        %v789 = vpop.f32.mrb[0].mxu0
        %790 = vmatprep.mubr.bf16.mxu0 0
        %791 = vmatmul.mubr.bf16.gmra.mrb[0].mxu0 %v580
        %v792 = vpop.f32.mrb[0].mxu0
        %v793 = vadd.f32 0.0, %v792
        %v794 = vpop.f32.mrb[0].mxu0
        %v795 = vpop.f32.mrb[0].mxu0
        %v796 = vadd.f32 0.0, %v795
        %v797 = vpop.f32.mrb[0].mxu0
        %798 = vmatprep.mubr.bf16.mxu0 0
        %799 = vmatmul.mubr.bf16.gmra.mrb[0].mxu0 %v581
        %v800 = vpop.f32.mrb[0].mxu0
        %v801 = vadd.f32 0.0, %v800
        %v802 = vpop.f32.mrb[0].mxu0
        %v803 = vpop.f32.mrb[0].mxu0
        %v804 = vadd.f32 0.0, %v803
        %v805 = vpop.f32.mrb[0].mxu0
        %806 = vdwg.mxu0
        %v807 = vpack.c.bf16 %v684, %v681
        %v808 = vpack.c.bf16 %v692, %v689
        %v809 = vpack.c.bf16 %v700, %v697
        %v810 = vpack.c.bf16 %v708, %v705
        %v811 = vpack.c.bf16 %v716, %v713
        %v812 = vpack.c.bf16 %v724, %v721
        %v813 = vpack.c.bf16 %v732, %v729
        %v814 = vpack.c.bf16 %v740, %v737
        %v815 = vpack.c.bf16 %v748, %v745
        %v816 = vpack.c.bf16 %v756, %v753
        %v817 = vpack.c.bf16 %v764, %v761
        %v818 = vpack.c.bf16 %v772, %v769
        %v819 = vpack.c.bf16 %v780, %v777
        %v820 = vpack.c.bf16 %v788, %v785
        %v821 = vpack.c.bf16 %v796, %v793
        %v822 = vpack.c.bf16 %v804, %v801
        %823 = vst [vmem:[#allocation4] sm:$0xff] %v807
        %824 = vst [vmem:[#allocation4 + $0x8] sm:$0xff] %v808
        %825 = vst [vmem:[#allocation4 + $0x10] sm:$0xff] %v809
        %826 = vst [vmem:[#allocation4 + $0x18] sm:$0xff] %v810
        %827 = vst [vmem:[#allocation4 + $0x20] sm:$0xff] %v811
        %828 = vst [vmem:[#allocation4 + $0x28] sm:$0xff] %v812
        %829 = vst [vmem:[#allocation4 + $0x30] sm:$0xff] %v813
        %830 = vst [vmem:[#allocation4 + $0x38] sm:$0xff] %v814
        %831 = vst [vmem:[#allocation4 + $0x40] sm:$0xff] %v815
        %832 = vst [vmem:[#allocation4 + $0x48] sm:$0xff] %v816
        %833 = vst [vmem:[#allocation4 + $0x50] sm:$0xff] %v817
        %834 = vst [vmem:[#allocation4 + $0x58] sm:$0xff] %v818
        %835 = vst [vmem:[#allocation4 + $0x60] sm:$0xff] %v819
        %836 = vst [vmem:[#allocation4 + $0x68] sm:$0xff] %v820
        %837 = vst [vmem:[#allocation4 + $0x70] sm:$0xff] %v821
        %838 = vst [vmem:[#allocation4 + $0x78] sm:$0xff] %v822
      $region109: #{graphnet_forward.1} parent=27 // pred_fallthru
        _
      %v839 = vld [vmem:[#allocation2] sm:$0xff]
      %v840 = vld [vmem:[#allocation2 + $0x8] sm:$0xff]
      %v841 = vld [vmem:[#allocation2 + $0x10] sm:$0xff]
      %v842 = vld [vmem:[#allocation2 + $0x18] sm:$0xff]
      %v843 = vld [vmem:[#allocation2 + $0x20] sm:$0xff]
      %v844 = vld [vmem:[#allocation2 + $0x28] sm:$0xff]
      %v845 = vld [vmem:[#allocation2 + $0x30] sm:$0xff]
      %v846 = vld [vmem:[#allocation2 + $0x38] sm:$0xff]
      %v847 = vld [vmem:[#allocation2 + $0x40] sm:$0xff]
      %v848 = vld [vmem:[#allocation2 + $0x48] sm:$0xff]
      %v849 = vld [vmem:[#allocation2 + $0x50] sm:$0xff]
      %v850 = vld [vmem:[#allocation2 + $0x58] sm:$0xff]
      %v851 = vld [vmem:[#allocation2 + $0x60] sm:$0xff]
      %v852 = vld [vmem:[#allocation2 + $0x68] sm:$0xff]
      %v853 = vld [vmem:[#allocation2 + $0x70] sm:$0xff]
      %v854 = vld [vmem:[#allocation2 + $0x78] sm:$0xff]
      %v855 = vld [vmem:[#allocation2 + $0x80] sm:$0xff]
      %v856 = vld [vmem:[#allocation2 + $0x88] sm:$0xff]
      %v857 = vld [vmem:[#allocation2 + $0x90] sm:$0xff]
      %v858 = vld [vmem:[#allocation2 + $0x98] sm:$0xff]
      %v859 = vld [vmem:[#allocation2 + $0xa0] sm:$0xff]
      %v860 = vld [vmem:[#allocation2 + $0xa8] sm:$0xff]
      %v861 = vld [vmem:[#allocation2 + $0xb0] sm:$0xff]
      %v862 = vld [vmem:[#allocation2 + $0xb8] sm:$0xff]
      %v863 = vld [vmem:[#allocation2 + $0xc0] sm:$0xff]
      %v864 = vld [vmem:[#allocation2 + $0xc8] sm:$0xff]
      %v865 = vld [vmem:[#allocation2 + $0xd0] sm:$0xff]
      %v866 = vld [vmem:[#allocation2 + $0xd8] sm:$0xff]
      %v867 = vld [vmem:[#allocation2 + $0xe0] sm:$0xff]
      %v868 = vld [vmem:[#allocation2 + $0xe8] sm:$0xff]
      %v869 = vld [vmem:[#allocation2 + $0xf0] sm:$0xff]
      %v870 = vld [vmem:[#allocation2 + $0xf8] sm:$0xff]
      %v871 = vld [vmem:[#allocation4] sm:$0xff]
      %v872 = vld [vmem:[#allocation4 + $0x8] sm:$0xff]
      %v873 = vld [vmem:[#allocation4 + $0x10] sm:$0xff]
      %v874 = vld [vmem:[#allocation4 + $0x18] sm:$0xff]
      %v875 = vld [vmem:[#allocation4 + $0x20] sm:$0xff]
      %v876 = vld [vmem:[#allocation4 + $0x28] sm:$0xff]
      %v877 = vld [vmem:[#allocation4 + $0x30] sm:$0xff]
      %v878 = vld [vmem:[#allocation4 + $0x38] sm:$0xff]
      %v879 = vld [vmem:[#allocation4 + $0x40] sm:$0xff]
      %v880 = vld [vmem:[#allocation4 + $0x48] sm:$0xff]
      %v881 = vld [vmem:[#allocation4 + $0x50] sm:$0xff]
      %v882 = vld [vmem:[#allocation4 + $0x58] sm:$0xff]
      %v883 = vld [vmem:[#allocation4 + $0x60] sm:$0xff]
      %v884 = vld [vmem:[#allocation4 + $0x68] sm:$0xff]
      %v885 = vld [vmem:[#allocation4 + $0x70] sm:$0xff]
      %v886 = vld [vmem:[#allocation4 + $0x78] sm:$0xff]
      %v887 = vld [vmem:[%s156] sm:$0x1]
      %v889 = vlaneseq
      %v890 = vshrl.u32 %v889, 7
      %v891 = vsub.s32 0, %v890
      %v892 = vrot.slane %v887, %v891
      %894 = vmatprep.subr.bf16.mxu0 0
      %895 = vmatpush1.bf16.msra.mxu0 %v871
      %896 = vmatprep.subr.bf16.mxu0 0
      %897 = vmatpush1.bf16.msra.mxu0 %v872
      %898 = vmatprep.subr.bf16.mxu0 0
      %899 = vmatpush1.bf16.msra.mxu0 %v873
      %900 = vmatprep.subr.bf16.mxu0 0
      %901 = vmatpush1.bf16.msra.mxu0 %v874
      %902 = vmatprep.subr.bf16.mxu0 0
      %903 = vmatpush1.bf16.msra.mxu0 %v875
      %904 = vmatprep.subr.bf16.mxu0 0
      %905 = vmatpush1.bf16.msra.mxu0 %v876
      %906 = vmatprep.subr.bf16.mxu0 0
      %907 = vmatpush1.bf16.msra.mxu0 %v877
      %908 = vmatprep.subr.bf16.mxu0 0
      %909 = vmatpush1.bf16.msra.mxu0 %v878
      %910 = vmatprep.subr.bf16.mxu0 0
      %911 = vmatpush1.bf16.msra.mxu0 %v879
      %912 = vmatprep.subr.bf16.mxu0 0
      %913 = vmatpush1.bf16.msra.mxu0 %v880
      %914 = vmatprep.subr.bf16.mxu0 0
      %915 = vmatpush1.bf16.msra.mxu0 %v881
      %916 = vmatprep.subr.bf16.mxu0 0
      %917 = vmatpush1.bf16.msra.mxu0 %v882
      %918 = vmatprep.subr.bf16.mxu0 0
      %919 = vmatpush1.bf16.msra.mxu0 %v883
      %920 = vmatprep.subr.bf16.mxu0 0
      %921 = vmatpush1.bf16.msra.mxu0 %v884
      %922 = vmatprep.subr.bf16.mxu0 0
      %923 = vmatpush1.bf16.msra.mxu0 %v885
      %924 = vmatprep.subr.bf16.mxu0 0
      %925 = vmatpush1.bf16.msra.mxu0 %v886
      %926 = vmatprep.mubr.bf16.mxu0 %v840
      %927 = vmatmul.mubr.bf16.gmra.mrb[0].mxu0 %v839
      %v928 = vpop.f32.mrb[0].mxu0
      %v929 = vadd.f32 %v892, %v928
      %v930 = vpop.f32.mrb[0].mxu0
      %v931 = vpop.f32.mrb[0].mxu0
      %v932 = vadd.f32 %v892, %v931
      %v933 = vpop.f32.mrb[0].mxu0
      %934 = vmatprep.mubr.bf16.mxu0 %v842
      %935 = vmatmul.mubr.bf16.gmra.mrb[0].mxu0 %v841
      %v936 = vpop.f32.mrb[0].mxu0
      %v937 = vadd.f32 %v892, %v936
      %v938 = vpop.f32.mrb[0].mxu0
      %v939 = vpop.f32.mrb[0].mxu0
      %v940 = vadd.f32 %v892, %v939
      %v941 = vpop.f32.mrb[0].mxu0
      %942 = vmatprep.mubr.bf16.mxu0 %v844
      %943 = vmatmul.mubr.bf16.gmra.mrb[0].mxu0 %v843
      %v944 = vpop.f32.mrb[0].mxu0
      %v945 = vadd.f32 %v892, %v944
      %v946 = vpop.f32.mrb[0].mxu0
      %v947 = vpop.f32.mrb[0].mxu0
      %v948 = vadd.f32 %v892, %v947
      %v949 = vpop.f32.mrb[0].mxu0
      %950 = vmatprep.mubr.bf16.mxu0 %v846
      %951 = vmatmul.mubr.bf16.gmra.mrb[0].mxu0 %v845
      %v952 = vpop.f32.mrb[0].mxu0
      %v953 = vadd.f32 %v892, %v952
      %v954 = vpop.f32.mrb[0].mxu0
      %v955 = vpop.f32.mrb[0].mxu0
      %v956 = vadd.f32 %v892, %v955
      %v957 = vpop.f32.mrb[0].mxu0
      %958 = vmatprep.mubr.bf16.mxu0 %v848
      %959 = vmatmul.mubr.bf16.gmra.mrb[0].mxu0 %v847
      %v960 = vpop.f32.mrb[0].mxu0
      %v961 = vadd.f32 %v892, %v960
      %v962 = vpop.f32.mrb[0].mxu0
      %v963 = vpop.f32.mrb[0].mxu0
      %v964 = vadd.f32 %v892, %v963
      %v965 = vpop.f32.mrb[0].mxu0
      %966 = vmatprep.mubr.bf16.mxu0 %v850
      %967 = vmatmul.mubr.bf16.gmra.mrb[0].mxu0 %v849
      %v968 = vpop.f32.mrb[0].mxu0
      %v969 = vadd.f32 %v892, %v968
      %v970 = vpop.f32.mrb[0].mxu0
      %v971 = vpop.f32.mrb[0].mxu0
      %v972 = vadd.f32 %v892, %v971
      %v973 = vpop.f32.mrb[0].mxu0
      %974 = vmatprep.mubr.bf16.mxu0 %v852
      %975 = vmatmul.mubr.bf16.gmra.mrb[0].mxu0 %v851
      %v976 = vpop.f32.mrb[0].mxu0
      %v977 = vadd.f32 %v892, %v976
      %v978 = vpop.f32.mrb[0].mxu0
      %v979 = vpop.f32.mrb[0].mxu0
      %v980 = vadd.f32 %v892, %v979
      %v981 = vpop.f32.mrb[0].mxu0
      %982 = vmatprep.mubr.bf16.mxu0 %v854
      %983 = vmatmul.mubr.bf16.gmra.mrb[0].mxu0 %v853
      %v984 = vpop.f32.mrb[0].mxu0
      %v985 = vadd.f32 %v892, %v984
      %v986 = vpop.f32.mrb[0].mxu0
      %v987 = vpop.f32.mrb[0].mxu0
      %v988 = vadd.f32 %v892, %v987
      %v989 = vpop.f32.mrb[0].mxu0
      %990 = vmatprep.mubr.bf16.mxu0 %v856
      %991 = vmatmul.mubr.bf16.gmra.mrb[0].mxu0 %v855
      %v992 = vpop.f32.mrb[0].mxu0
      %v993 = vadd.f32 %v892, %v992
      %v994 = vpop.f32.mrb[0].mxu0
      %v995 = vpop.f32.mrb[0].mxu0
      %v996 = vadd.f32 %v892, %v995
      %v997 = vpop.f32.mrb[0].mxu0
      %998 = vmatprep.mubr.bf16.mxu0 %v858
      %999 = vmatmul.mubr.bf16.gmra.mrb[0].mxu0 %v857
      %v1000 = vpop.f32.mrb[0].mxu0
      %v1001 = vadd.f32 %v892, %v1000
      %v1002 = vpop.f32.mrb[0].mxu0
      %v1003 = vpop.f32.mrb[0].mxu0
      %v1004 = vadd.f32 %v892, %v1003
      %v1005 = vpop.f32.mrb[0].mxu0
      %1006 = vmatprep.mubr.bf16.mxu0 %v860
      %1007 = vmatmul.mubr.bf16.gmra.mrb[0].mxu0 %v859
      %v1008 = vpop.f32.mrb[0].mxu0
      %v1009 = vadd.f32 %v892, %v1008
      %v1010 = vpop.f32.mrb[0].mxu0
      %v1011 = vpop.f32.mrb[0].mxu0
      %v1012 = vadd.f32 %v892, %v1011
      %v1013 = vpop.f32.mrb[0].mxu0
      %1014 = vmatprep.mubr.bf16.mxu0 %v862
      %1015 = vmatmul.mubr.bf16.gmra.mrb[0].mxu0 %v861
      %v1016 = vpop.f32.mrb[0].mxu0
      %v1017 = vadd.f32 %v892, %v1016
      %v1018 = vpop.f32.mrb[0].mxu0
      %v1019 = vpop.f32.mrb[0].mxu0
      %v1020 = vadd.f32 %v892, %v1019
      %v1021 = vpop.f32.mrb[0].mxu0
      %1022 = vmatprep.mubr.bf16.mxu0 %v864
      %1023 = vmatmul.mubr.bf16.gmra.mrb[0].mxu0 %v863
      %v1024 = vpop.f32.mrb[0].mxu0
      %v1025 = vadd.f32 %v892, %v1024
      %v1026 = vpop.f32.mrb[0].mxu0
      %v1027 = vpop.f32.mrb[0].mxu0
      %v1028 = vadd.f32 %v892, %v1027
      %v1029 = vpop.f32.mrb[0].mxu0
      %1030 = vmatprep.mubr.bf16.mxu0 %v866
      %1031 = vmatmul.mubr.bf16.gmra.mrb[0].mxu0 %v865
      %v1032 = vpop.f32.mrb[0].mxu0
      %v1033 = vadd.f32 %v892, %v1032
      %v1034 = vpop.f32.mrb[0].mxu0
      %v1035 = vpop.f32.mrb[0].mxu0
      %v1036 = vadd.f32 %v892, %v1035
      %v1037 = vpop.f32.mrb[0].mxu0
      %1038 = vmatprep.mubr.bf16.mxu0 %v868
      %1039 = vmatmul.mubr.bf16.gmra.mrb[0].mxu0 %v867
      %v1040 = vpop.f32.mrb[0].mxu0
      %v1041 = vadd.f32 %v892, %v1040
      %v1042 = vpop.f32.mrb[0].mxu0
      %v1043 = vpop.f32.mrb[0].mxu0
      %v1044 = vadd.f32 %v892, %v1043
      %v1045 = vpop.f32.mrb[0].mxu0
      %1046 = vmatprep.mubr.bf16.mxu0 %v870
      %1047 = vmatmul.mubr.bf16.gmra.mrb[0].mxu0 %v869
      %v1048 = vpop.f32.mrb[0].mxu0
      %v1049 = vadd.f32 %v892, %v1048
      %v1050 = vpop.f32.mrb[0].mxu0
      %v1051 = vpop.f32.mrb[0].mxu0
      %v1052 = vadd.f32 %v892, %v1051
      %v1053 = vpop.f32.mrb[0].mxu0
      %1054 = vdwg.mxu0
      %s1055 = smul.u32 %s20, 256
      %p1056 = scmp.lt.s32.totalorder %s19, 3
      %p1057 = scmp.eq.s32.totalorder %s559, 0
      %p1058 = pnand %p1057, %p1056
      %p1059 = pneg %p1058
      // Predicated region
      $region110: #{graphnet_forward.1} parent=27 // pred_check
        _
      $region111: #{graphnet_forward.1} parent=27 // pred_check_branch
        %1061 = sbr.rel (%p1058) target = $region113
      $region112: #{graphnet_forward.1} parent=27 // pred_region
        %v1062 = vpack.c.bf16 %v932, %v929
        %v1063 = vpack.c.bf16 %v940, %v937
        %v1064 = vpack.c.bf16 %v948, %v945
        %v1065 = vpack.c.bf16 %v956, %v953
        %v1066 = vpack.c.bf16 %v964, %v961
        %v1067 = vpack.c.bf16 %v972, %v969
        %v1068 = vpack.c.bf16 %v980, %v977
        %v1069 = vpack.c.bf16 %v988, %v985
        %v1070 = vpack.c.bf16 %v996, %v993
        %v1071 = vpack.c.bf16 %v1004, %v1001
        %v1072 = vpack.c.bf16 %v1012, %v1009
        %v1073 = vpack.c.bf16 %v1020, %v1017
        %v1074 = vpack.c.bf16 %v1028, %v1025
        %v1075 = vpack.c.bf16 %v1036, %v1033
        %v1076 = vpack.c.bf16 %v1044, %v1041
        %v1077 = vpack.c.bf16 %v1052, %v1049
        %s1078 = sshra.s32 %s1055, 4
        %s1079 = sand.u32 %s1055, 15
        %s1080 = sadd.s32 %s1078, 16
        %s1081 = smul.addr %s1080, 8
        %s1082 = scalar_lea.vmem [#allocation3], %s1081
        %1083 = vst [vmem:[%s1082] sm:$0xff] %v1062
        %1084 = vst [vmem:[%s1082 + $0x8] sm:$0xff] %v1063
        %1085 = vst [vmem:[%s1082 + $0x10] sm:$0xff] %v1064
        %1086 = vst [vmem:[%s1082 + $0x18] sm:$0xff] %v1065
        %1087 = vst [vmem:[%s1082 + $0x20] sm:$0xff] %v1066
        %1088 = vst [vmem:[%s1082 + $0x28] sm:$0xff] %v1067
        %1089 = vst [vmem:[%s1082 + $0x30] sm:$0xff] %v1068
        %1090 = vst [vmem:[%s1082 + $0x38] sm:$0xff] %v1069
        %1091 = vst [vmem:[%s1082 + $0x40] sm:$0xff] %v1070
        %1092 = vst [vmem:[%s1082 + $0x48] sm:$0xff] %v1071
        %1093 = vst [vmem:[%s1082 + $0x50] sm:$0xff] %v1072
        %1094 = vst [vmem:[%s1082 + $0x58] sm:$0xff] %v1073
        %1095 = vst [vmem:[%s1082 + $0x60] sm:$0xff] %v1074
        %1096 = vst [vmem:[%s1082 + $0x68] sm:$0xff] %v1075
        %1097 = vst [vmem:[%s1082 + $0x70] sm:$0xff] %v1076
        %1098 = vst [vmem:[%s1082 + $0x78] sm:$0xff] %v1077
      $region113: #{graphnet_forward.1} parent=27 // pred_fallthru
        _
      %p1099 = scmp.eq.s32.totalorder %s559, 1
      %p1100 = pnand %p1099, %p1056
      %p1101 = pneg %p1100
      // Predicated region
      $region114: #{graphnet_forward.1} parent=27 // pred_check
        _
      $region115: #{graphnet_forward.1} parent=27 // pred_check_branch
        %1103 = sbr.rel (%p1100) target = $region117
      $region116: #{graphnet_forward.1} parent=27 // pred_region
        %v1104 = vpack.c.bf16 %v932, %v929
        %v1105 = vpack.c.bf16 %v940, %v937
        %v1106 = vpack.c.bf16 %v948, %v945
        %v1107 = vpack.c.bf16 %v956, %v953
        %v1108 = vpack.c.bf16 %v964, %v961
        %v1109 = vpack.c.bf16 %v972, %v969
        %v1110 = vpack.c.bf16 %v980, %v977
        %v1111 = vpack.c.bf16 %v988, %v985
        %v1112 = vpack.c.bf16 %v996, %v993
        %v1113 = vpack.c.bf16 %v1004, %v1001
        %v1114 = vpack.c.bf16 %v1012, %v1009
        %v1115 = vpack.c.bf16 %v1020, %v1017
        %v1116 = vpack.c.bf16 %v1028, %v1025
        %v1117 = vpack.c.bf16 %v1036, %v1033
        %v1118 = vpack.c.bf16 %v1044, %v1041
        %v1119 = vpack.c.bf16 %v1052, %v1049
        %s1120 = sshra.s32 %s1055, 4
        %s1121 = sand.u32 %s1055, 15
        %s1122 = smul.addr %s1120, 8
        %s1123 = scalar_lea.vmem [#allocation3], %s1122
        %1124 = vst [vmem:[%s1123] sm:$0xff] %v1104
        %1125 = vst [vmem:[%s1123 + $0x8] sm:$0xff] %v1105
        %1126 = vst [vmem:[%s1123 + $0x10] sm:$0xff] %v1106
        %1127 = vst [vmem:[%s1123 + $0x18] sm:$0xff] %v1107
        %1128 = vst [vmem:[%s1123 + $0x20] sm:$0xff] %v1108
        %1129 = vst [vmem:[%s1123 + $0x28] sm:$0xff] %v1109
        %1130 = vst [vmem:[%s1123 + $0x30] sm:$0xff] %v1110
        %1131 = vst [vmem:[%s1123 + $0x38] sm:$0xff] %v1111
        %1132 = vst [vmem:[%s1123 + $0x40] sm:$0xff] %v1112
        %1133 = vst [vmem:[%s1123 + $0x48] sm:$0xff] %v1113
        %1134 = vst [vmem:[%s1123 + $0x50] sm:$0xff] %v1114
        %1135 = vst [vmem:[%s1123 + $0x58] sm:$0xff] %v1115
        %1136 = vst [vmem:[%s1123 + $0x60] sm:$0xff] %v1116
        %1137 = vst [vmem:[%s1123 + $0x68] sm:$0xff] %v1117
        %1138 = vst [vmem:[%s1123 + $0x70] sm:$0xff] %v1118
        %1139 = vst [vmem:[%s1123 + $0x78] sm:$0xff] %v1119
      $region117: #{graphnet_forward.1} parent=27 // pred_fallthru
        _
      %p1140 = scmp.ge.s32.totalorder %s19, 3
      // Predicated region
      $region118: #{graphnet_forward.1} parent=27 // pred_check
        %p1141 = pneg %p1140
      $region119: #{graphnet_forward.1} parent=27 // pred_check_branch
        %1143 = sbr.rel (%p1141) target = $region121
      $region120: #{graphnet_forward.1} parent=27 // pred_region
        %v1144 = vand.u32 2147483647, %v929
        %v1145 = vand.u32 2147483647, %v932
        %v1146 = vand.u32 2147483647, %v937
        %v1147 = vand.u32 2147483647, %v940
        %v1148 = vand.u32 2147483647, %v945
        %v1149 = vand.u32 2147483647, %v948
        %v1150 = vand.u32 2147483647, %v953
        %v1151 = vand.u32 2147483647, %v956
        %v1152 = vand.u32 2147483647, %v961
        %v1153 = vand.u32 2147483647, %v964
        %v1154 = vand.u32 2147483647, %v969
        %v1155 = vand.u32 2147483647, %v972
        %v1156 = vand.u32 2147483647, %v977
        %v1157 = vand.u32 2147483647, %v980
        %v1158 = vand.u32 2147483647, %v985
        %v1159 = vand.u32 2147483647, %v988
        %v1160 = vand.u32 2147483647, %v993
        %v1161 = vand.u32 2147483647, %v996
        %v1162 = vand.u32 2147483647, %v1001
        %v1163 = vand.u32 2147483647, %v1004
        %v1164 = vand.u32 2147483647, %v1009
        %v1165 = vand.u32 2147483647, %v1012
        %v1166 = vand.u32 2147483647, %v1017
        %v1167 = vand.u32 2147483647, %v1020
        %v1168 = vand.u32 2147483647, %v1025
        %v1169 = vand.u32 2147483647, %v1028
        %v1170 = vand.u32 2147483647, %v1033
        %v1171 = vand.u32 2147483647, %v1036
        %v1172 = vand.u32 2147483647, %v1041
        %v1173 = vand.u32 2147483647, %v1044
        %v1174 = vand.u32 2147483647, %v1049
        %v1175 = vand.u32 2147483647, %v1052
        %s1176 = scalar_lea.vmem %s4, %s1055
        %1177 = vst [vmem:[%s1176] sm:$0xff] %v1144
        %1178 = vst [vmem:[%s1176 + $0x8] sm:$0xff] %v1145
        %1179 = vst [vmem:[%s1176 + $0x10] sm:$0xff] %v1146
        %1180 = vst [vmem:[%s1176 + $0x18] sm:$0xff] %v1147
        %1181 = vst [vmem:[%s1176 + $0x20] sm:$0xff] %v1148
        %1182 = vst [vmem:[%s1176 + $0x28] sm:$0xff] %v1149
        %1183 = vst [vmem:[%s1176 + $0x30] sm:$0xff] %v1150
        %1184 = vst [vmem:[%s1176 + $0x38] sm:$0xff] %v1151
        %1185 = vst [vmem:[%s1176 + $0x40] sm:$0xff] %v1152
        %1186 = vst [vmem:[%s1176 + $0x48] sm:$0xff] %v1153
        %1187 = vst [vmem:[%s1176 + $0x50] sm:$0xff] %v1154
        %1188 = vst [vmem:[%s1176 + $0x58] sm:$0xff] %v1155
        %1189 = vst [vmem:[%s1176 + $0x60] sm:$0xff] %v1156
        %1190 = vst [vmem:[%s1176 + $0x68] sm:$0xff] %v1157
        %1191 = vst [vmem:[%s1176 + $0x70] sm:$0xff] %v1158
        %1192 = vst [vmem:[%s1176 + $0x78] sm:$0xff] %v1159
        %1193 = vst [vmem:[%s1176 + $0x80] sm:$0xff] %v1160
        %1194 = vst [vmem:[%s1176 + $0x88] sm:$0xff] %v1161
        %1195 = vst [vmem:[%s1176 + $0x90] sm:$0xff] %v1162
        %1196 = vst [vmem:[%s1176 + $0x98] sm:$0xff] %v1163
        %1197 = vst [vmem:[%s1176 + $0xa0] sm:$0xff] %v1164
        %1198 = vst [vmem:[%s1176 + $0xa8] sm:$0xff] %v1165
        %1199 = vst [vmem:[%s1176 + $0xb0] sm:$0xff] %v1166
        %1200 = vst [vmem:[%s1176 + $0xb8] sm:$0xff] %v1167
        %1201 = vst [vmem:[%s1176 + $0xc0] sm:$0xff] %v1168
        %1202 = vst [vmem:[%s1176 + $0xc8] sm:$0xff] %v1169
        %1203 = vst [vmem:[%s1176 + $0xd0] sm:$0xff] %v1170
        %1204 = vst [vmem:[%s1176 + $0xd8] sm:$0xff] %v1171
        %1205 = vst [vmem:[%s1176 + $0xe0] sm:$0xff] %v1172
        %1206 = vst [vmem:[%s1176 + $0xe8] sm:$0xff] %v1173
        %1207 = vst [vmem:[%s1176 + $0xf0] sm:$0xff] %v1174
        %1208 = vst [vmem:[%s1176 + $0xf8] sm:$0xff] %v1175
      $region121: #{graphnet_forward.1} parent=27 // pred_fallthru
        _
      // Predicated region
      $region122: #{graphnet_forward.1} parent=27 // pred_check
        %p1209 = pneg %p92
      $region123: #{graphnet_forward.1} parent=27 // pred_check_branch
        %1211 = sbr.rel (%p1209) target = $region125
      $region124: #{graphnet_forward.1} parent=27 // pred_region
        _
      $region125: #{graphnet_forward.1} parent=27 // pred_fallthru
        _
      // Predicated region
      $region126: #{graphnet_forward.1} parent=27 // pred_check
        %p1212 = pneg %p92
      $region127: #{graphnet_forward.1} parent=27 // pred_check_branch
        %1214 = sbr.rel (%p1212) target = $region129
      $region128: #{graphnet_forward.1} parent=27 // pred_region
        _
      $region129: #{graphnet_forward.1} parent=27 // pred_fallthru
        _
    $region28: #{graphnet_forward.1} parent=5 // pred_fallthru
      _
    %p1215 = scmp.le.s32.totalorder 2, %s10
    // Predicated region
    $region130: #{graphnet_forward.1} parent=5 // pred_check
      %p1216 = pneg %p1215
    $region131: #{graphnet_forward.1} parent=5 // pred_check_branch
      %1218 = sbr.rel (%p1216) target = $region133
    $region132: #{graphnet_forward.1} parent=5 // pred_region
      %s1219 = ssub.s32 %s10, 2
    $region133: #{graphnet_forward.1} parent=5 // pred_fallthru
      _
  $region6: #{graphnet_forward.1} parent=0 // loop_footer
    %s14 = sadd.s32 1, %s10
  $region7: #{graphnet_forward.1} parent=0 // loop_footer_branch
    %9 = sbr.rel target = $region3
  $region8: #{graphnet_forward.1} parent=0 // loop_exit
    _

</llo_original>
